<compile_context>
chip_gen: v7x
topology: tpu7x:2x2x1
jax: 0.10.0
libtpu: 0.0.40
codegen_flags: <defaults>
</compile_context>

<pallas_src>
import functools
import math

import jax
import jax.numpy as jnp
from jax import lax
from jax.experimental import pallas as pl
from jax.experimental.pallas import tpu as pltpu

_LN_EPS = 1e-5
# Raise v5e's 16 MiB scoped-VMEM default; 32 MiB == v6e/v7x default and is
# safely under v7x's 64 MiB physical VMEM.
_VMEM_LIMIT_BYTES = 32 * 1024 * 1024


# --------------------------------------------------------------------------
# Fused multi-head attention + output projection + residual + LayerNorm body
# --------------------------------------------------------------------------

def _mha_residual_ln(x_q, x_kv, wq, bq, wk, bk, wv, bv, wo_ref, bo, gamma, beta,
                     *, n_heads, dim_q, dim_k, dim_v, masked, eps):
    s_q = x_q.shape[0]
    s_kv = x_kv.shape[0]

    # One wide projection matmul per operand fills the MXU lanes and keeps the
    # intermediates lane-dense (at real sizes H*D is a multiple of 256, which
    # matches the v6e/v7x MXU width).
    q = jnp.dot(x_q, wq, preferred_element_type=jnp.float32) + bq     # (Sq, H*Dq)
    k = jnp.dot(x_kv, wk, preferred_element_type=jnp.float32) + bk    # (Sk, H*Dk)
    v = jnp.dot(x_kv, wv, preferred_element_type=jnp.float32) + bv    # (Sk, H*Dv)

    scale = 1.0 / math.sqrt(dim_k)
    if masked:
        row = lax.broadcasted_iota(jnp.int32, (s_q, s_kv), 0)
        col = lax.broadcasted_iota(jnp.int32, (s_q, s_kv), 1)
        mask = (col <= row).astype(jnp.float32)

    # Accumulate heads straight into the Dm-wide output projection
    # (mathematically identical to concat(heads) @ Wo).
    proj = jnp.zeros_like(x_q) + bo                                    # (Sq, Dm)
    for h in range(n_heads):     # small static head count -> unrolled
        qh = q[:, h * dim_q:(h + 1) * dim_q]
        kh = k[:, h * dim_k:(h + 1) * dim_k]
        vh = v[:, h * dim_v:(h + 1) * dim_v]
        # Contract the last dims directly: no explicit k.T / relayout.
        logits = lax.dot_general(qh, kh, (((1,), (1,)), ((), ())),
                                 preferred_element_type=jnp.float32) * scale
        if masked:
            # Reference semantics: qk * tril(ones) (+ an identically-zero term).
            logits = logits * mask
        logits = logits - jnp.max(logits, axis=-1, keepdims=True)
        p = jnp.exp(logits)
        attn = p * pl.reciprocal(jnp.sum(p, axis=-1, keepdims=True), approx=True)
        head = jnp.dot(attn, vh, preferred_element_type=jnp.float32)  # (Sq, Dv)
        proj = proj + jnp.dot(head, wo_ref[h * dim_v:(h + 1) * dim_v, :],
                              preferred_element_type=jnp.float32)

    # Residual (ResidualConnection residx=0 -> the q input) + LayerNorm epilogue.
    z = x_q + proj
    mu = jnp.mean(z, axis=-1, keepdims=True)
    var = jnp.mean((z - mu) ** 2, axis=-1, keepdims=True)
    return (z - mu) * lax.rsqrt(var + eps) * gamma + beta


def _self_mha_ln_kernel(x_ref, wq_ref, wk_ref, wv_ref, bq_ref, bk_ref, bv_ref,
                        wo_ref, bo_ref, g_ref, b_ref, o_ref,
                        *, n_heads, dim_q, dim_k, dim_v, masked, eps):
    x = x_ref[0]   # q == k == v input, DMA'd only once
    o_ref[0] = _mha_residual_ln(
        x, x, wq_ref[...], bq_ref[...], wk_ref[...], bk_ref[...],
        wv_ref[...], bv_ref[...], wo_ref, bo_ref[...], g_ref[...], b_ref[...],
        n_heads=n_heads, dim_q=dim_q, dim_k=dim_k, dim_v=dim_v,
        masked=masked, eps=eps)


def _cross_mha_ln_kernel(q_ref, kv_ref, wq_ref, wk_ref, wv_ref, bq_ref, bk_ref,
                         bv_ref, wo_ref, bo_ref, g_ref, b_ref, o_ref,
                         *, n_heads, dim_q, dim_k, dim_v, masked, eps):
    o_ref[0] = _mha_residual_ln(
        q_ref[0], kv_ref[0], wq_ref[...], bq_ref[...], wk_ref[...], bk_ref[...],
        wv_ref[...], bv_ref[...], wo_ref, bo_ref[...], g_ref[...], b_ref[...],
        n_heads=n_heads, dim_q=dim_q, dim_k=dim_k, dim_v=dim_v,
        masked=masked, eps=eps)


def _ffn_residual_ln_kernel(x_ref, w1_ref, b1_ref, w2_ref, b2_ref, g_ref, b_ref,
                            o_ref, *, eps):
    x = x_ref[...]
    h = jnp.maximum(
        jnp.dot(x, w1_ref[...], preferred_element_type=jnp.float32) + b1_ref[...],
        0.0)
    f = jnp.dot(h, w2_ref[...], preferred_element_type=jnp.float32) + b2_ref[...]
    z = x + f
    mu = jnp.mean(z, axis=-1, keepdims=True)
    var = jnp.mean((z - mu) ** 2, axis=-1, keepdims=True)
    o_ref[...] = (z - mu) * lax.rsqrt(var + eps) * g_ref[...] + b_ref[...]


# --------------------------------------------------------------------------
# Wrappers
# --------------------------------------------------------------------------

def _mha_weight_specs(H, Dm, Dq, Dk, Dv):
    c = lambda b: (0, 0)   # weights/LN params are grid-invariant (stay resident)
    return [
        pl.BlockSpec((Dm, H * Dq), c),   # wq (fused)
        pl.BlockSpec((Dm, H * Dk), c),   # wk (fused)
        pl.BlockSpec((Dm, H * Dv), c),   # wv (fused)
        pl.BlockSpec((1, H * Dq), c),    # bq
        pl.BlockSpec((1, H * Dk), c),    # bk
        pl.BlockSpec((1, H * Dv), c),    # bv
        pl.BlockSpec((H * Dv, Dm), c),   # wo
        pl.BlockSpec((1, Dm), c),        # bo
        pl.BlockSpec((1, Dm), c),        # ln gamma
        pl.BlockSpec((1, Dm), c),        # ln beta
    ]


_COMPILER_PARAMS = pltpu.CompilerParams(
    dimension_semantics=("parallel",),          # shard grid across TCs on v7x
    vmem_limit_bytes=_VMEM_LIMIT_BYTES)


def self_attention_ln(x, p, gamma, beta, *, masked):
    """LayerNorm(x + MHA(x, x, x)) in one fused pallas_call (grid over batch)."""
    B, S, Dm = x.shape
    H, Dq, Dk, Dv = p["n_heads"], p["dim_q"], p["dim_k"], p["dim_v"]
    kernel = functools.partial(_self_mha_ln_kernel, n_heads=H, dim_q=Dq,
                               dim_k=Dk, dim_v=Dv, masked=masked, eps=_LN_EPS)
    return pl.pallas_call(
        kernel,
        out_shape=jax.ShapeDtypeStruct((B, S, Dm), jnp.float32),
        grid=(B,),
        in_specs=[pl.BlockSpec((1, S, Dm), lambda b: (b, 0, 0))]
                 + _mha_weight_specs(H, Dm, Dq, Dk, Dv),
        out_specs=pl.BlockSpec((1, S, Dm), lambda b: (b, 0, 0)),
        compiler_params=_COMPILER_PARAMS,
    )(x, p["wq"], p["wk"], p["wv"], p["bq"], p["bk"], p["bv"],
      p["wo"], p["bo"], gamma, beta)


def cross_attention_ln(q_in, kv_in, p, gamma, beta, *, masked=False):
    """LayerNorm(q_in + MHA(q_in, kv_in, kv_in)) fused (grid over batch)."""
    B, S, Dm = q_in.shape
    Skv = kv_in.shape[1]
    H, Dq, Dk, Dv = p["n_heads"], p["dim_q"], p["dim_k"], p["dim_v"]
    kernel = functools.partial(_cross_mha_ln_kernel, n_heads=H, dim_q=Dq,
                               dim_k=Dk, dim_v=Dv, masked=masked, eps=_LN_EPS)
    return pl.pallas_call(
        kernel,
        out_shape=jax.ShapeDtypeStruct((B, S, Dm), jnp.float32),
        grid=(B,),
        in_specs=[pl.BlockSpec((1, S, Dm), lambda b: (b, 0, 0)),
                  pl.BlockSpec((1, Skv, Dm), lambda b: (b, 0, 0))]
                 + _mha_weight_specs(H, Dm, Dq, Dk, Dv),
        out_specs=pl.BlockSpec((1, S, Dm), lambda b: (b, 0, 0)),
        compiler_params=_COMPILER_PARAMS,
    )(q_in, kv_in, p["wq"], p["wk"], p["wv"], p["bq"], p["bk"], p["bv"],
      p["wo"], p["bo"], gamma, beta)


def _row_block(n, target=512):
    """Largest row-tile <= target that divides n and satisfies the (8,128) rule."""
    if n <= target:
        return n
    for cand in range(target - target % 8, 7, -8):
        if n % cand == 0:
            return cand
    return n


def ffn_ln(x, ff_params, gamma, beta):
    """LayerNorm(x + W2(relu(W1 x))) fused, tiled over rows of (B*S, Dm)."""
    B, S, Dm = x.shape
    w1, b1, w2, b2 = ff_params
    Dff = w1.shape[1]
    N = B * S
    bn = _row_block(N)
    c = lambda i: (0, 0)
    out = pl.pallas_call(
        functools.partial(_ffn_residual_ln_kernel, eps=_LN_EPS),
        out_shape=jax.ShapeDtypeStruct((N, Dm), jnp.float32),
        grid=(N // bn,),
        in_specs=[
            pl.BlockSpec((bn, Dm), lambda i: (i, 0)),   # x (also the residual)
            pl.BlockSpec((Dm, Dff), c),
            pl.BlockSpec((1, Dff), c),
            pl.BlockSpec((Dff, Dm), c),
            pl.BlockSpec((1, Dm), c),
            pl.BlockSpec((1, Dm), c),                   # ln gamma
            pl.BlockSpec((1, Dm), c),                   # ln beta
        ],
        out_specs=pl.BlockSpec((bn, Dm), lambda i: (i, 0)),
        compiler_params=_COMPILER_PARAMS,
    )(x.reshape(N, Dm), w1, b1, w2, b2, gamma, beta)
    return out.reshape(B, S, Dm)


def decoder_layer(xin, memory, params):
    h1 = self_attention_ln(xin, params["masked_attn"],
                           params["ln1_g"], params["ln1_b"], masked=True)
    h2 = cross_attention_ln(h1, memory, params["attn"],
                            params["ln2_g"], params["ln2_b"], masked=False)
    return ffn_ln(h2, params["ff"], params["ln3_g"], params["ln3_b"])


# --------------------------------------------------------------------------
# Deterministic parameter init (PyTorch nn.Linear-style uniform)
# --------------------------------------------------------------------------

def _init_linear(key, din, dout):
    kw, kb = jax.random.split(key)
    bound = 1.0 / math.sqrt(din)
    w = jax.random.uniform(kw, (din, dout), jnp.float32, -bound, bound)
    b = jax.random.uniform(kb, (1, dout), jnp.float32, -bound, bound)
    return w, b


def _init_mha(key, n_heads, dim_m, dim_q, dim_k, dim_v):
    keys = jax.random.split(key, 3 * n_heads + 1)
    wq, bq, wk, bk, wv, bv = [], [], [], [], [], []
    for h in range(n_heads):
        w, b = _init_linear(keys[3 * h + 0], dim_m, dim_q); wq.append(w); bq.append(b)
        w, b = _init_linear(keys[3 * h + 1], dim_m, dim_k); wk.append(w); bk.append(b)
        w, b = _init_linear(keys[3 * h + 2], dim_m, dim_v); wv.append(w); bv.append(b)
    wo, bo = _init_linear(keys[-1], n_heads * dim_v, dim_m)
    # Fuse per-head projection weights into wide (Dm, H*D) matrices so the
    # kernel can run ONE MXU matmul per operand instead of H narrow ones.
    return dict(
        wq=jnp.concatenate(wq, axis=1), wk=jnp.concatenate(wk, axis=1),
        wv=jnp.concatenate(wv, axis=1),
        bq=jnp.concatenate(bq, axis=1), bk=jnp.concatenate(bk, axis=1),
        bv=jnp.concatenate(bv, axis=1),
        wo=wo, bo=bo,
        n_heads=n_heads, dim_q=dim_q, dim_k=dim_k, dim_v=dim_v,
    )


def init_decoder_params(key, dim_m, n_heads, dim_ff, dim_q, dim_k, dim_v):
    k1, k2, k3, k4 = jax.random.split(key, 4)
    w1, b1 = _init_linear(k3, dim_m, dim_ff)
    w2, b2 = _init_linear(k4, dim_ff, dim_m)
    ones = jnp.ones((1, dim_m), jnp.float32)
    zeros = jnp.zeros((1, dim_m), jnp.float32)
    return dict(
        masked_attn=_init_mha(k1, n_heads, dim_m, dim_q, dim_k, dim_v),
        attn=_init_mha(k2, n_heads, dim_m, dim_q, dim_k, dim_v),
        ff=(w1, b1, w2, b2),
        ln1_g=ones, ln1_b=zeros, ln2_g=ones, ln2_b=zeros, ln3_g=ones, ln3_b=zeros,
    )


# --------------------------------------------------------------------------
# Pure-JAX reference (for correctness check)
# --------------------------------------------------------------------------

def _ref_mha(q_in, k_in, v_in, p, masked):
    H, Dq, Dk, Dv = p["n_heads"], p["dim_q"], p["dim_k"], p["dim_v"]
    outs = []
    for h in range(H):
        q = q_in @ p["wq"][:, h * Dq:(h + 1) * Dq] + p["bq"][:, h * Dq:(h + 1) * Dq]
        k = k_in @ p["wk"][:, h * Dk:(h + 1) * Dk] + p["bk"][:, h * Dk:(h + 1) * Dk]
        v = v_in @ p["wv"][:, h * Dv:(h + 1) * Dv] + p["bv"][:, h * Dv:(h + 1) * Dv]
        qk = jnp.einsum("bqd,bkd->bqk", q, k) / (Dk ** 0.5)
        if masked:
            s = qk.shape[-1]
            qk = qk * jnp.tril(jnp.ones((s, s), jnp.float32))
        attn = jax.nn.softmax(qk, axis=-1)
        outs.append(jnp.einsum("bqk,bkd->bqd", attn, v))
    concat = jnp.concatenate(outs, axis=-1)
    return concat @ p["wo"] + p["bo"]


def _ref_ln(z, g, b, eps=_LN_EPS):
    mu = jnp.mean(z, axis=-1, keepdims=True)
    var = jnp.mean((z - mu) ** 2, axis=-1, keepdims=True)
    return (z - mu) / jnp.sqrt(var + eps) * g + b


def _ref_decoder(xin, memory, params):
    a1 = _ref_mha(xin, xin, xin, params["masked_attn"], True)
    h1 = _ref_ln(xin + a1, params["ln1_g"], params["ln1_b"])
    a2 = _ref_mha(h1, memory, memory, params["attn"], False)
    h2 = _ref_ln(h1 + a2, params["ln2_g"], params["ln2_b"])
    w1, b1, w2, b2 = params["ff"]
    f = jnp.maximum(h2 @ w1 + b1, 0.0) @ w2 + b2
    return _ref_ln(h2 + f, params["ln3_g"], params["ln3_b"])


# --------------------------------------------------------------------------

if __name__ == "__main__":
    # Small but faithful configuration of DecoderLayer
    B, S = 2, 8
    DIM_M, N_HEADS, DIM_FF = 32, 2, 64
    DIM_Q = DIM_K = DIM_V = 32

    key = jax.random.PRNGKey(0)
    kx, km, kp = jax.random.split(key, 3)
    xin = jax.random.normal(kx, (B, S, DIM_M), jnp.float32)
    memory = jax.random.normal(km, (B, S, DIM_M), jnp.float32)
    params = init_decoder_params(kp, DIM_M, N_HEADS, DIM_FF, DIM_Q, DIM_K, DIM_V)

    out = jax.block_until_ready(decoder_layer(xin, memory, params))
    ref = _ref_decoder(xin, memory, params)

    assert out.shape == (B, S, DIM_M)
    # All math is f32 except the softmax denominator, which uses the EUP
    # approximate reciprocal (per perf feedback); tolerance sized accordingly.
    max_err = float(jnp.max(jnp.abs(out - ref)))
    assert jnp.allclose(out, ref, atol=2e-2, rtol=2e-2), \
        f"mismatch vs reference (max abs err {max_err})"
    print("KERNEL_OK")
</pallas_src>

<mosaic_0001>
module attributes {stable_mosaic.version = 11 : i64} {
  func.func @_self_mha_ln_kernel(%arg0: i32, %arg1: memref<1x8x32xf32, #tpu.memory_space<vmem>>, %arg2: memref<32x64xf32, #tpu.memory_space<vmem>>, %arg3: memref<32x64xf32, #tpu.memory_space<vmem>>, %arg4: memref<32x64xf32, #tpu.memory_space<vmem>>, %arg5: memref<1x64xf32, #tpu.memory_space<vmem>>, %arg6: memref<1x64xf32, #tpu.memory_space<vmem>>, %arg7: memref<1x64xf32, #tpu.memory_space<vmem>>, %arg8: memref<64x32xf32, #tpu.memory_space<vmem>>, %arg9: memref<1x32xf32, #tpu.memory_space<vmem>>, %arg10: memref<1x32xf32, #tpu.memory_space<vmem>>, %arg11: memref<1x32xf32, #tpu.memory_space<vmem>>, %arg12: memref<1x8x32xf32, #tpu.memory_space<vmem>>) attributes {dimension_semantics = [#tpu.dimension_semantics<parallel>], iteration_bounds = array<i64: 2>, scalar_prefetch = 0 : i64, scratch_operands = 0 : i64, tpu.core_type = #tpu.core_type<tc>, window_params = [{transform_indices = @transform_0, window_bounds = array<i64: 1, 8, 32>}, {pipeline_mode = #tpu.pipeline_mode<synchronous>, transform_indices = @transform_1, window_bounds = array<i64: 32, 64>}, {pipeline_mode = #tpu.pipeline_mode<synchronous>, transform_indices = @transform_2, window_bounds = array<i64: 32, 64>}, {pipeline_mode = #tpu.pipeline_mode<synchronous>, transform_indices = @transform_3, window_bounds = array<i64: 32, 64>}, {pipeline_mode = #tpu.pipeline_mode<synchronous>, transform_indices = @transform_4, window_bounds = array<i64: 1, 64>}, {pipeline_mode = #tpu.pipeline_mode<synchronous>, transform_indices = @transform_5, window_bounds = array<i64: 1, 64>}, {pipeline_mode = #tpu.pipeline_mode<synchronous>, transform_indices = @transform_6, window_bounds = array<i64: 1, 64>}, {pipeline_mode = #tpu.pipeline_mode<synchronous>, transform_indices = @transform_7, window_bounds = array<i64: 64, 32>}, {pipeline_mode = #tpu.pipeline_mode<synchronous>, transform_indices = @transform_8, window_bounds = array<i64: 1, 32>}, {pipeline_mode = #tpu.pipeline_mode<synchronous>, transform_indices = @transform_9, window_bounds = array<i64: 1, 32>}, {pipeline_mode = #tpu.pipeline_mode<synchronous>, transform_indices = @transform_10, window_bounds = array<i64: 1, 32>}, {transform_indices = @transform_11, window_bounds = array<i64: 1, 8, 32>}]} {
    %c0 = arith.constant 0 : index
    %c0_0 = arith.constant 0 : index
    %c0_1 = arith.constant 0 : index
    %0 = vector.load %arg1[%c0, %c0_0, %c0_1] : memref<1x8x32xf32, #tpu.memory_space<vmem>>, vector<1x8x32xf32>
    %1 = vector.shape_cast %0 : vector<1x8x32xf32> to vector<8x32xf32>
    %c0_2 = arith.constant 0 : index
    %c0_3 = arith.constant 0 : index
    %2 = vector.load %arg2[%c0_2, %c0_3] : memref<32x64xf32, #tpu.memory_space<vmem>>, vector<32x64xf32>
    %c0_4 = arith.constant 0 : index
    %c0_5 = arith.constant 0 : index
    %3 = vector.load %arg5[%c0_4, %c0_5] : memref<1x64xf32, #tpu.memory_space<vmem>>, vector<1x64xf32>
    %c0_6 = arith.constant 0 : index
    %c0_7 = arith.constant 0 : index
    %4 = vector.load %arg3[%c0_6, %c0_7] : memref<32x64xf32, #tpu.memory_space<vmem>>, vector<32x64xf32>
    %c0_8 = arith.constant 0 : index
    %c0_9 = arith.constant 0 : index
    %5 = vector.load %arg6[%c0_8, %c0_9] : memref<1x64xf32, #tpu.memory_space<vmem>>, vector<1x64xf32>
    %c0_10 = arith.constant 0 : index
    %c0_11 = arith.constant 0 : index
    %6 = vector.load %arg4[%c0_10, %c0_11] : memref<32x64xf32, #tpu.memory_space<vmem>>, vector<32x64xf32>
    %c0_12 = arith.constant 0 : index
    %c0_13 = arith.constant 0 : index
    %7 = vector.load %arg7[%c0_12, %c0_13] : memref<1x64xf32, #tpu.memory_space<vmem>>, vector<1x64xf32>
    %c0_14 = arith.constant 0 : index
    %c0_15 = arith.constant 0 : index
    %8 = vector.load %arg9[%c0_14, %c0_15] : memref<1x32xf32, #tpu.memory_space<vmem>>, vector<1x32xf32>
    %c0_16 = arith.constant 0 : index
    %c0_17 = arith.constant 0 : index
    %9 = vector.load %arg10[%c0_16, %c0_17] : memref<1x32xf32, #tpu.memory_space<vmem>>, vector<1x32xf32>
    %c0_18 = arith.constant 0 : index
    %c0_19 = arith.constant 0 : index
    %10 = vector.load %arg11[%c0_18, %c0_19] : memref<1x32xf32, #tpu.memory_space<vmem>>, vector<1x32xf32>
    %cst = arith.constant dense<0.000000e+00> : vector<8x64xf32>
    %11 = tpu.matmul %1, %2, %cst {dimension_numbers = #tpu.dot_dimension_numbers<[1], [0], [0], [1], [0, 0, 1, 1], [], []>} : vector<8x32xf32>, vector<32x64xf32>, vector<8x64xf32> -> vector<8x64xf32>
    %12 = vector.broadcast %3 : vector<1x64xf32> to vector<8x64xf32>
    %13 = arith.addf %11, %12 : vector<8x64xf32>
    %cst_20 = arith.constant dense<0.000000e+00> : vector<8x64xf32>
    %14 = tpu.matmul %1, %4, %cst_20 {dimension_numbers = #tpu.dot_dimension_numbers<[1], [0], [0], [1], [0, 0, 1, 1], [], []>} : vector<8x32xf32>, vector<32x64xf32>, vector<8x64xf32> -> vector<8x64xf32>
    %15 = vector.broadcast %5 : vector<1x64xf32> to vector<8x64xf32>
    %16 = arith.addf %14, %15 : vector<8x64xf32>
    %cst_21 = arith.constant dense<0.000000e+00> : vector<8x64xf32>
    %17 = tpu.matmul %1, %6, %cst_21 {dimension_numbers = #tpu.dot_dimension_numbers<[1], [0], [0], [1], [0, 0, 1, 1], [], []>} : vector<8x32xf32>, vector<32x64xf32>, vector<8x64xf32> -> vector<8x64xf32>
    %18 = vector.broadcast %7 : vector<1x64xf32> to vector<8x64xf32>
    %19 = arith.addf %17, %18 : vector<8x64xf32>
    %20 = tpu.iota {dimensions = array<i32: 0>} : vector<8x8xi32>
    %21 = tpu.iota {dimensions = array<i32: 1>} : vector<8x8xi32>
    %22 = arith.cmpi sle, %21, %20 : vector<8x8xi32>
    %23 = arith.extui %22 : vector<8x8xi1> to vector<8x8xi32>
    %24 = arith.sitofp %23 : vector<8x8xi32> to vector<8x8xf32>
    %cst_22 = arith.constant 0.000000e+00 : f32
    %25 = vector.broadcast %cst_22 : f32 to vector<8x32xf32>
    %26 = vector.broadcast %8 : vector<1x32xf32> to vector<8x32xf32>
    %27 = arith.addf %25, %26 : vector<8x32xf32>
    %28 = vector.extract_strided_slice %13 {offsets = [0, 0], sizes = [8, 32], strides = [1, 1]} : vector<8x64xf32> to vector<8x32xf32>
    %29 = vector.extract_strided_slice %16 {offsets = [0, 0], sizes = [8, 32], strides = [1, 1]} : vector<8x64xf32> to vector<8x32xf32>
    %30 = vector.extract_strided_slice %19 {offsets = [0, 0], sizes = [8, 32], strides = [1, 1]} : vector<8x64xf32> to vector<8x32xf32>
    %cst_23 = arith.constant dense<0.000000e+00> : vector<8x8xf32>
    %31 = tpu.matmul %28, %29, %cst_23 {dimension_numbers = #tpu.dot_dimension_numbers<[1], [1], [0], [0], [0, 0, 1, 0], [], []>} : vector<8x32xf32>, vector<8x32xf32>, vector<8x8xf32> -> vector<8x8xf32>
    %cst_24 = arith.constant 0.176776692 : f32
    %32 = vector.broadcast %cst_24 : f32 to vector<8x8xf32>
    %33 = arith.mulf %31, %32 : vector<8x8xf32>
    %34 = arith.mulf %33, %24 : vector<8x8xf32>
    %cst_25 = arith.constant dense<0xFF800000> : vector<8xf32>
    %35 = vector.multi_reduction <maximumf>, %34, %cst_25 [1] : vector<8x8xf32> to vector<8xf32>
    %36 = vector.shape_cast %35 : vector<8xf32> to vector<8x1xf32>
    %37 = vector.broadcast %36 : vector<8x1xf32> to vector<8x8xf32>
    %38 = arith.subf %34, %37 : vector<8x8xf32>
    %39 = math.exp %38 : vector<8x8xf32>
    %cst_26 = arith.constant dense<0.000000e+00> : vector<8xf32>
    %40 = vector.multi_reduction <add>, %39, %cst_26 [1] : vector<8x8xf32> to vector<8xf32>
    %41 = vector.shape_cast %40 : vector<8xf32> to vector<8x1xf32>
    %42 = tpu.reciprocal %41 {approx = true} : vector<8x1xf32> -> vector<8x1xf32>
    %43 = vector.broadcast %42 : vector<8x1xf32> to vector<8x8xf32>
    %44 = arith.mulf %39, %43 : vector<8x8xf32>
    %cst_27 = arith.constant dense<0.000000e+00> : vector<8x32xf32>
    %45 = tpu.matmul %44, %30, %cst_27 {dimension_numbers = #tpu.dot_dimension_numbers<[1], [0], [0], [1], [0, 0, 1, 1], [], []>} : vector<8x8xf32>, vector<8x32xf32>, vector<8x32xf32> -> vector<8x32xf32>
    %c0_28 = arith.constant 0 : index
    %c0_29 = arith.constant 0 : index
    %46 = vector.load %arg8[%c0_28, %c0_29] : memref<64x32xf32, #tpu.memory_space<vmem>>, vector<32x32xf32>
    %cst_30 = arith.constant dense<0.000000e+00> : vector<8x32xf32>
    %47 = tpu.matmul %45, %46, %cst_30 {dimension_numbers = #tpu.dot_dimension_numbers<[1], [0], [0], [1], [0, 0, 1, 1], [], []>} : vector<8x32xf32>, vector<32x32xf32>, vector<8x32xf32> -> vector<8x32xf32>
    %48 = arith.addf %27, %47 : vector<8x32xf32>
    %49 = vector.extract_strided_slice %13 {offsets = [0, 32], sizes = [8, 32], strides = [1, 1]} : vector<8x64xf32> to vector<8x32xf32>
    %50 = vector.extract_strided_slice %16 {offsets = [0, 32], sizes = [8, 32], strides = [1, 1]} : vector<8x64xf32> to vector<8x32xf32>
    %51 = vector.extract_strided_slice %19 {offsets = [0, 32], sizes = [8, 32], strides = [1, 1]} : vector<8x64xf32> to vector<8x32xf32>
    %cst_31 = arith.constant dense<0.000000e+00> : vector<8x8xf32>
    %52 = tpu.matmul %49, %50, %cst_31 {dimension_numbers = #tpu.dot_dimension_numbers<[1], [1], [0], [0], [0, 0, 1, 0], [], []>} : vector<8x32xf32>, vector<8x32xf32>, vector<8x8xf32> -> vector<8x8xf32>
    %cst_32 = arith.constant 0.176776692 : f32
    %53 = vector.broadcast %cst_32 : f32 to vector<8x8xf32>
    %54 = arith.mulf %52, %53 : vector<8x8xf32>
    %55 = arith.mulf %54, %24 : vector<8x8xf32>
    %cst_33 = arith.constant dense<0xFF800000> : vector<8xf32>
    %56 = vector.multi_reduction <maximumf>, %55, %cst_33 [1] : vector<8x8xf32> to vector<8xf32>
    %57 = vector.shape_cast %56 : vector<8xf32> to vector<8x1xf32>
    %58 = vector.broadcast %57 : vector<8x1xf32> to vector<8x8xf32>
    %59 = arith.subf %55, %58 : vector<8x8xf32>
    %60 = math.exp %59 : vector<8x8xf32>
    %cst_34 = arith.constant dense<0.000000e+00> : vector<8xf32>
    %61 = vector.multi_reduction <add>, %60, %cst_34 [1] : vector<8x8xf32> to vector<8xf32>
    %62 = vector.shape_cast %61 : vector<8xf32> to vector<8x1xf32>
    %63 = tpu.reciprocal %62 {approx = true} : vector<8x1xf32> -> vector<8x1xf32>
    %64 = vector.broadcast %63 : vector<8x1xf32> to vector<8x8xf32>
    %65 = arith.mulf %60, %64 : vector<8x8xf32>
    %cst_35 = arith.constant dense<0.000000e+00> : vector<8x32xf32>
    %66 = tpu.matmul %65, %51, %cst_35 {dimension_numbers = #tpu.dot_dimension_numbers<[1], [0], [0], [1], [0, 0, 1, 1], [], []>} : vector<8x8xf32>, vector<8x32xf32>, vector<8x32xf32> -> vector<8x32xf32>
    %c32 = arith.constant 32 : index
    %c0_36 = arith.constant 0 : index
    %67 = vector.load %arg8[%c32, %c0_36] : memref<64x32xf32, #tpu.memory_space<vmem>>, vector<32x32xf32>
    %cst_37 = arith.constant dense<0.000000e+00> : vector<8x32xf32>
    %68 = tpu.matmul %66, %67, %cst_37 {dimension_numbers = #tpu.dot_dimension_numbers<[1], [0], [0], [1], [0, 0, 1, 1], [], []>} : vector<8x32xf32>, vector<32x32xf32>, vector<8x32xf32> -> vector<8x32xf32>
    %69 = arith.addf %48, %68 : vector<8x32xf32>
    %70 = arith.addf %1, %69 : vector<8x32xf32>
    %cst_38 = arith.constant dense<0.000000e+00> : vector<8xf32>
    %71 = vector.multi_reduction <add>, %70, %cst_38 [1] : vector<8x32xf32> to vector<8xf32>
    %72 = vector.shape_cast %71 : vector<8xf32> to vector<8x1xf32>
    %cst_39 = arith.constant 3.200000e+01 : f32
    %73 = vector.broadcast %cst_39 : f32 to vector<8x1xf32>
    %74 = arith.divf %72, %73 : vector<8x1xf32>
    %75 = vector.broadcast %74 : vector<8x1xf32> to vector<8x32xf32>
    %76 = arith.subf %70, %75 : vector<8x32xf32>
    %77 = arith.mulf %76, %76 : vector<8x32xf32>
    %cst_40 = arith.constant dense<0.000000e+00> : vector<8xf32>
    %78 = vector.multi_reduction <add>, %77, %cst_40 [1] : vector<8x32xf32> to vector<8xf32>
    %79 = vector.shape_cast %78 : vector<8xf32> to vector<8x1xf32>
    %cst_41 = arith.constant 3.200000e+01 : f32
    %80 = vector.broadcast %cst_41 : f32 to vector<8x1xf32>
    %81 = arith.divf %79, %80 : vector<8x1xf32>
    %82 = vector.broadcast %74 : vector<8x1xf32> to vector<8x32xf32>
    %83 = arith.subf %70, %82 : vector<8x32xf32>
    %cst_42 = arith.constant 9.99999974E-6 : f32
    %84 = vector.broadcast %cst_42 : f32 to vector<8x1xf32>
    %85 = arith.addf %81, %84 : vector<8x1xf32>
    %86 = math.rsqrt %85 : vector<8x1xf32>
    %87 = vector.broadcast %86 : vector<8x1xf32> to vector<8x32xf32>
    %88 = arith.mulf %83, %87 : vector<8x32xf32>
    %89 = vector.broadcast %9 : vector<1x32xf32> to vector<8x32xf32>
    %90 = arith.mulf %88, %89 : vector<8x32xf32>
    %91 = vector.broadcast %10 : vector<1x32xf32> to vector<8x32xf32>
    %92 = arith.addf %90, %91 : vector<8x32xf32>
    %c0_43 = arith.constant 0 : index
    %c0_44 = arith.constant 0 : index
    %c0_45 = arith.constant 0 : index
    %93 = vector.load %arg12[%c0_43, %c0_44, %c0_45] : memref<1x8x32xf32, #tpu.memory_space<vmem>>, vector<1x8x32xf32>
    %94 = vector.shape_cast %93 : vector<1x8x32xf32> to vector<8x32xf32>
    %95 = vector.shape_cast %92 : vector<8x32xf32> to vector<1x8x32xf32>
    tpu.vector_store %arg12[%c0_43, %c0_44, %c0_45], %95 {strides = array<i32>} : memref<1x8x32xf32, #tpu.memory_space<vmem>>, vector<1x8x32xf32>,
    return
  }
  func.func @transform_0(%arg0: i32) -> (i32, i32, i32) {
    %c0_i32 = arith.constant 0 : i32
    %c0_i32_0 = arith.constant 0 : i32
    %c0_i32_1 = arith.constant 0 : i32
    return %arg0, %c0_i32, %c0_i32_0 : i32, i32, i32
  }
  func.func @transform_1(%arg0: i32) -> (i32, i32) {
    %c0_i32 = arith.constant 0 : i32
    %c0_i32_0 = arith.constant 0 : i32
    %c0_i32_1 = arith.constant 0 : i32
    return %c0_i32, %c0_i32_0 : i32, i32
  }
  func.func @transform_2(%arg0: i32) -> (i32, i32) {
    %c0_i32 = arith.constant 0 : i32
    %c0_i32_0 = arith.constant 0 : i32
    %c0_i32_1 = arith.constant 0 : i32
    return %c0_i32, %c0_i32_0 : i32, i32
  }
  func.func @transform_3(%arg0: i32) -> (i32, i32) {
    %c0_i32 = arith.constant 0 : i32
    %c0_i32_0 = arith.constant 0 : i32
    %c0_i32_1 = arith.constant 0 : i32
    return %c0_i32, %c0_i32_0 : i32, i32
  }
  func.func @transform_4(%arg0: i32) -> (i32, i32) {
    %c0_i32 = arith.constant 0 : i32
    %c0_i32_0 = arith.constant 0 : i32
    %c0_i32_1 = arith.constant 0 : i32
    return %c0_i32, %c0_i32_0 : i32, i32
  }
  func.func @transform_5(%arg0: i32) -> (i32, i32) {
    %c0_i32 = arith.constant 0 : i32
    %c0_i32_0 = arith.constant 0 : i32
    %c0_i32_1 = arith.constant 0 : i32
    return %c0_i32, %c0_i32_0 : i32, i32
  }
  func.func @transform_6(%arg0: i32) -> (i32, i32) {
    %c0_i32 = arith.constant 0 : i32
    %c0_i32_0 = arith.constant 0 : i32
    %c0_i32_1 = arith.constant 0 : i32
    return %c0_i32, %c0_i32_0 : i32, i32
  }
  func.func @transform_7(%arg0: i32) -> (i32, i32) {
    %c0_i32 = arith.constant 0 : i32
    %c0_i32_0 = arith.constant 0 : i32
    %c0_i32_1 = arith.constant 0 : i32
    return %c0_i32, %c0_i32_0 : i32, i32
  }
  func.func @transform_8(%arg0: i32) -> (i32, i32) {
    %c0_i32 = arith.constant 0 : i32
    %c0_i32_0 = arith.constant 0 : i32
    %c0_i32_1 = arith.constant 0 : i32
    return %c0_i32, %c0_i32_0 : i32, i32
  }
  func.func @transform_9(%arg0: i32) -> (i32, i32) {
    %c0_i32 = arith.constant 0 : i32
    %c0_i32_0 = arith.constant 0 : i32
    %c0_i32_1 = arith.constant 0 : i32
    return %c0_i32, %c0_i32_0 : i32, i32
  }
  func.func @transform_10(%arg0: i32) -> (i32, i32) {
    %c0_i32 = arith.constant 0 : i32
    %c0_i32_0 = arith.constant 0 : i32
    %c0_i32_1 = arith.constant 0 : i32
    return %c0_i32, %c0_i32_0 : i32, i32
  }
  func.func @transform_11(%arg0: i32) -> (i32, i32, i32) {
    %c0_i32 = arith.constant 0 : i32
    %c0_i32_0 = arith.constant 0 : i32
    %c0_i32_1 = arith.constant 0 : i32
    return %arg0, %c0_i32, %c0_i32_0 : i32, i32, i32
  }
}

</mosaic_0001>

<llo_original>
// kernel: tpu_custom_call.1
$region0: #{tpu_custom_call.1}
  #allocation0 [shape = 'u32[]', space=smem, size = 0x4, offset = 0x4, fixed_abs, tag = 'smem constant byte address 0x4 - core index']
  #allocation1 [shape = 'u32[144,128]{1,0:T(1,128)}', space=vmem, size = 0x12000, scoped, tag = 'internal scratch']
  %s0 = inlined_call_operand.hbm [shape: f32[2,8,32], index: 0, kind: input, shape index: {}]
  %s1 = inlined_call_operand.vmem [shape: f32[32,64], index: 1, kind: input, shape index: {}]
  %s2 = inlined_call_operand.vmem [shape: f32[32,64], index: 2, kind: input, shape index: {}]
  %s3 = inlined_call_operand.vmem [shape: f32[32,64], index: 3, kind: input, shape index: {}]
  %s4 = inlined_call_operand.vmem [shape: f32[1,64], index: 4, kind: input, shape index: {}]
  %s5 = inlined_call_operand.vmem [shape: f32[1,64], index: 5, kind: input, shape index: {}]
  %s6 = inlined_call_operand.vmem [shape: f32[1,64], index: 6, kind: input, shape index: {}]
  %s7 = inlined_call_operand.vmem [shape: f32[64,32], index: 7, kind: input, shape index: {}]
  %s8 = inlined_call_operand.vmem [shape: f32[1,32], index: 8, kind: input, shape index: {}]
  %s9 = inlined_call_operand.vmem [shape: f32[1,32], index: 9, kind: input, shape index: {}]
  %s10 = inlined_call_operand.vmem [shape: f32[1,32], index: 10, kind: input, shape index: {}]
  %s11 = inlined_call_operand.hbm [shape: f32[2,8,32], index: 11, kind: output, shape index: {}]
  %s12 = sld [smem:[#allocation0]]
  $region81: #{tpu_custom_call.1} parent=0
    _
  %s14 = ssub.s32 1, %s12
  %s15 = scalar_select 0, %s14, %s12
  $region1: #{tpu_custom_call.1} parent=0
    #allocation2 [shape = 'u8[8192]{0}', space=vmem, size = 0x2000, scoped, tag = 'input window, operand 0']
    #allocation3 [shape = 's32[2]{0}', space=sflag, size = 0x8, scoped, tag = 'scoped memory for tpu_custom_call.1']
    #allocation4 [shape = 's32[2]{0}', space=sflag, size = 0x8, scoped, tag = 'scoped memory for tpu_custom_call.1']
    #allocation5 [shape = 'u8[8192]{0}', space=vmem, size = 0x2000, scoped, tag = 'output window, operand 0']
    %16 = vsyncpa [#allocation3], 0
    %s17 = scalar_lea.sflag [#allocation3], 1
    %18 = vsyncpa %s17, 0
    %19 = vsyncpa [#allocation4], 0
    %s20 = scalar_lea.sflag [#allocation4], 1
    %21 = vsyncpa %s20, 0
    loop: start=0, step=1, limit=4
    $region2: #{tpu_custom_call.1} parent=1 // loop_pre_header
      _
    $region3: #{tpu_custom_call.1} parent=1 // loop_header
      %s23 = sphi 0, %s27
      %p24 = scmp.ge.s32.totalorder %s23, 4
      %s33 = sphi 0, %s35
      %s36 = sphi 0, %s33
      %s37 = sphi 0, %s36
      %s53 = sphi 0, %s37
      %s57 = sphi 0, %s57
      %s59 = sphi 0, %s57
      %s60 = sphi 0, %s59
      %s74 = sphi 0, %s60
      %s78 = sphi 0, %s78
      %s80 = sphi 0, %s78
      %s81 = sphi 0, %s80
      %s95 = sphi 0, %s81
      %s99 = sphi 0, %s99
      %s101 = sphi 0, %s99
      %s102 = sphi 0, %s101
      %s116 = sphi 0, %s102
      %s120 = sphi 0, %s120
      %s122 = sphi 0, %s120
      %s123 = sphi 0, %s122
      %s137 = sphi 0, %s123
      %s141 = sphi 0, %s141
      %s143 = sphi 0, %s141
      %s144 = sphi 0, %s143
      %s158 = sphi 0, %s144
      %s162 = sphi 0, %s162
      %s164 = sphi 0, %s162
      %s165 = sphi 0, %s164
      %s179 = sphi 0, %s165
      %s183 = sphi 0, %s183
      %s185 = sphi 0, %s183
      %s186 = sphi 0, %s185
      %s200 = sphi 0, %s186
      %s204 = sphi 0, %s204
      %s206 = sphi 0, %s204
      %s207 = sphi 0, %s206
      %s221 = sphi 0, %s207
      %s225 = sphi 0, %s225
      %s227 = sphi 0, %s225
      %s228 = sphi 0, %s227
      %s242 = sphi 0, %s228
      %s246 = sphi 0, %s246
      %s248 = sphi 0, %s246
      %s249 = sphi 0, %s248
      %s263 = sphi 0, %s249
      %s269 = sphi 0, %s271
      %s272 = sphi 0, %s269
      %s273 = sphi 0, %s272
      %s289 = sphi 0, %s273
    $region4: #{tpu_custom_call.1} parent=1 // loop_header_branch
      %26 = sbr.rel (%p24) target = $region8
    $region5: #{tpu_custom_call.1} parent=1 // loop_body
      %s28 = ssub.s32 %s23, 1
      %s29 = ssub.s32 %s23, 2
      %s30 = sadd.s32 %s23, 1
      %s31 = ssub.s32 %s23, %s30
      %p32 = scmp.eq.s32.totalorder %s31, 0
      %s34 = sadd.s32 %s33, 1
      %s35 = scalar_select %p32, %s33, %s34
      %p38 = pneg %p32
      %p39 = scmp.eq.s32.totalorder %s23, 1
      %p40 = por %p38, %p39
      %p41 = scmp.ne.s32.totalorder %s33, %s36
      %p42 = scmp.eq.s32.totalorder %s23, 0
      %p43 = por %p41, %p42
      %p44 = scmp.ne.s32.totalorder %s33, %s36
      %p45 = scmp.eq.s32.totalorder %s28, 1
      %p46 = por %p44, %p45
      %p47 = scmp.ne.s32.totalorder %s36, %s37
      %p48 = scmp.eq.s32.totalorder %s28, 0
      %p49 = por %p47, %p48
      %p50 = scmp.ne.s32.totalorder %s36, %s37
      %p51 = scmp.eq.s32.totalorder %s29, 1
      %p52 = por %p50, %p51
      %p54 = scmp.ne.s32.totalorder %s37, %s53
      %p55 = scmp.eq.s32.totalorder %s29, 0
      %p56 = por %p54, %p55
      %s58 = sadd.s32 %s57, 1
      %p61 = scmp.eq.s32.totalorder %s23, 1
      %p62 = scmp.ne.s32.totalorder %s57, %s59
      %p63 = scmp.eq.s32.totalorder %s23, 0
      %p64 = por %p62, %p63
      %p65 = scmp.ne.s32.totalorder %s57, %s59
      %p66 = scmp.eq.s32.totalorder %s28, 1
      %p67 = por %p65, %p66
      %p68 = scmp.ne.s32.totalorder %s59, %s60
      %p69 = scmp.eq.s32.totalorder %s28, 0
      %p70 = por %p68, %p69
      %p71 = scmp.ne.s32.totalorder %s59, %s60
      %p72 = scmp.eq.s32.totalorder %s29, 1
      %p73 = por %p71, %p72
      %p75 = scmp.ne.s32.totalorder %s60, %s74
      %p76 = scmp.eq.s32.totalorder %s29, 0
      %p77 = por %p75, %p76
      %s79 = sadd.s32 %s78, 1
      %p82 = scmp.eq.s32.totalorder %s23, 1
      %p83 = scmp.ne.s32.totalorder %s78, %s80
      %p84 = scmp.eq.s32.totalorder %s23, 0
      %p85 = por %p83, %p84
      %p86 = scmp.ne.s32.totalorder %s78, %s80
      %p87 = scmp.eq.s32.totalorder %s28, 1
      %p88 = por %p86, %p87
      %p89 = scmp.ne.s32.totalorder %s80, %s81
      %p90 = scmp.eq.s32.totalorder %s28, 0
      %p91 = por %p89, %p90
      %p92 = scmp.ne.s32.totalorder %s80, %s81
      %p93 = scmp.eq.s32.totalorder %s29, 1
      %p94 = por %p92, %p93
      %p96 = scmp.ne.s32.totalorder %s81, %s95
      %p97 = scmp.eq.s32.totalorder %s29, 0
      %p98 = por %p96, %p97
      %s100 = sadd.s32 %s99, 1
      %p103 = scmp.eq.s32.totalorder %s23, 1
      %p104 = scmp.ne.s32.totalorder %s99, %s101
      %p105 = scmp.eq.s32.totalorder %s23, 0
      %p106 = por %p104, %p105
      %p107 = scmp.ne.s32.totalorder %s99, %s101
      %p108 = scmp.eq.s32.totalorder %s28, 1
      %p109 = por %p107, %p108
      %p110 = scmp.ne.s32.totalorder %s101, %s102
      %p111 = scmp.eq.s32.totalorder %s28, 0
      %p112 = por %p110, %p111
      %p113 = scmp.ne.s32.totalorder %s101, %s102
      %p114 = scmp.eq.s32.totalorder %s29, 1
      %p115 = por %p113, %p114
      %p117 = scmp.ne.s32.totalorder %s102, %s116
      %p118 = scmp.eq.s32.totalorder %s29, 0
      %p119 = por %p117, %p118
      %s121 = sadd.s32 %s120, 1
      %p124 = scmp.eq.s32.totalorder %s23, 1
      %p125 = scmp.ne.s32.totalorder %s120, %s122
      %p126 = scmp.eq.s32.totalorder %s23, 0
      %p127 = por %p125, %p126
      %p128 = scmp.ne.s32.totalorder %s120, %s122
      %p129 = scmp.eq.s32.totalorder %s28, 1
      %p130 = por %p128, %p129
      %p131 = scmp.ne.s32.totalorder %s122, %s123
      %p132 = scmp.eq.s32.totalorder %s28, 0
      %p133 = por %p131, %p132
      %p134 = scmp.ne.s32.totalorder %s122, %s123
      %p135 = scmp.eq.s32.totalorder %s29, 1
      %p136 = por %p134, %p135
      %p138 = scmp.ne.s32.totalorder %s123, %s137
      %p139 = scmp.eq.s32.totalorder %s29, 0
      %p140 = por %p138, %p139
      %s142 = sadd.s32 %s141, 1
      %p145 = scmp.eq.s32.totalorder %s23, 1
      %p146 = scmp.ne.s32.totalorder %s141, %s143
      %p147 = scmp.eq.s32.totalorder %s23, 0
      %p148 = por %p146, %p147
      %p149 = scmp.ne.s32.totalorder %s141, %s143
      %p150 = scmp.eq.s32.totalorder %s28, 1
      %p151 = por %p149, %p150
      %p152 = scmp.ne.s32.totalorder %s143, %s144
      %p153 = scmp.eq.s32.totalorder %s28, 0
      %p154 = por %p152, %p153
      %p155 = scmp.ne.s32.totalorder %s143, %s144
      %p156 = scmp.eq.s32.totalorder %s29, 1
      %p157 = por %p155, %p156
      %p159 = scmp.ne.s32.totalorder %s144, %s158
      %p160 = scmp.eq.s32.totalorder %s29, 0
      %p161 = por %p159, %p160
      %s163 = sadd.s32 %s162, 1
      %p166 = scmp.eq.s32.totalorder %s23, 1
      %p167 = scmp.ne.s32.totalorder %s162, %s164
      %p168 = scmp.eq.s32.totalorder %s23, 0
      %p169 = por %p167, %p168
      %p170 = scmp.ne.s32.totalorder %s162, %s164
      %p171 = scmp.eq.s32.totalorder %s28, 1
      %p172 = por %p170, %p171
      %p173 = scmp.ne.s32.totalorder %s164, %s165
      %p174 = scmp.eq.s32.totalorder %s28, 0
      %p175 = por %p173, %p174
      %p176 = scmp.ne.s32.totalorder %s164, %s165
      %p177 = scmp.eq.s32.totalorder %s29, 1
      %p178 = por %p176, %p177
      %p180 = scmp.ne.s32.totalorder %s165, %s179
      %p181 = scmp.eq.s32.totalorder %s29, 0
      %p182 = por %p180, %p181
      %s184 = sadd.s32 %s183, 1
      %p187 = scmp.eq.s32.totalorder %s23, 1
      %p188 = scmp.ne.s32.totalorder %s183, %s185
      %p189 = scmp.eq.s32.totalorder %s23, 0
      %p190 = por %p188, %p189
      %p191 = scmp.ne.s32.totalorder %s183, %s185
      %p192 = scmp.eq.s32.totalorder %s28, 1
      %p193 = por %p191, %p192
      %p194 = scmp.ne.s32.totalorder %s185, %s186
      %p195 = scmp.eq.s32.totalorder %s28, 0
      %p196 = por %p194, %p195
      %p197 = scmp.ne.s32.totalorder %s185, %s186
      %p198 = scmp.eq.s32.totalorder %s29, 1
      %p199 = por %p197, %p198
      %p201 = scmp.ne.s32.totalorder %s186, %s200
      %p202 = scmp.eq.s32.totalorder %s29, 0
      %p203 = por %p201, %p202
      %s205 = sadd.s32 %s204, 1
      %p208 = scmp.eq.s32.totalorder %s23, 1
      %p209 = scmp.ne.s32.totalorder %s204, %s206
      %p210 = scmp.eq.s32.totalorder %s23, 0
      %p211 = por %p209, %p210
      %p212 = scmp.ne.s32.totalorder %s204, %s206
      %p213 = scmp.eq.s32.totalorder %s28, 1
      %p214 = por %p212, %p213
      %p215 = scmp.ne.s32.totalorder %s206, %s207
      %p216 = scmp.eq.s32.totalorder %s28, 0
      %p217 = por %p215, %p216
      %p218 = scmp.ne.s32.totalorder %s206, %s207
      %p219 = scmp.eq.s32.totalorder %s29, 1
      %p220 = por %p218, %p219
      %p222 = scmp.ne.s32.totalorder %s207, %s221
      %p223 = scmp.eq.s32.totalorder %s29, 0
      %p224 = por %p222, %p223
      %s226 = sadd.s32 %s225, 1
      %p229 = scmp.eq.s32.totalorder %s23, 1
      %p230 = scmp.ne.s32.totalorder %s225, %s227
      %p231 = scmp.eq.s32.totalorder %s23, 0
      %p232 = por %p230, %p231
      %p233 = scmp.ne.s32.totalorder %s225, %s227
      %p234 = scmp.eq.s32.totalorder %s28, 1
      %p235 = por %p233, %p234
      %p236 = scmp.ne.s32.totalorder %s227, %s228
      %p237 = scmp.eq.s32.totalorder %s28, 0
      %p238 = por %p236, %p237
      %p239 = scmp.ne.s32.totalorder %s227, %s228
      %p240 = scmp.eq.s32.totalorder %s29, 1
      %p241 = por %p239, %p240
      %p243 = scmp.ne.s32.totalorder %s228, %s242
      %p244 = scmp.eq.s32.totalorder %s29, 0
      %p245 = por %p243, %p244
      %s247 = sadd.s32 %s246, 1
      %p250 = scmp.eq.s32.totalorder %s23, 1
      %p251 = scmp.ne.s32.totalorder %s246, %s248
      %p252 = scmp.eq.s32.totalorder %s23, 0
      %p253 = por %p251, %p252
      %p254 = scmp.ne.s32.totalorder %s246, %s248
      %p255 = scmp.eq.s32.totalorder %s28, 1
      %p256 = por %p254, %p255
      %p257 = scmp.ne.s32.totalorder %s248, %s249
      %p258 = scmp.eq.s32.totalorder %s28, 0
      %p259 = por %p257, %p258
      %p260 = scmp.ne.s32.totalorder %s248, %s249
      %p261 = scmp.eq.s32.totalorder %s29, 1
      %p262 = por %p260, %p261
      %p264 = scmp.ne.s32.totalorder %s249, %s263
      %p265 = scmp.eq.s32.totalorder %s29, 0
      %p266 = por %p264, %p265
      %s267 = ssub.s32 %s23, %s30
      %p268 = scmp.eq.s32.totalorder %s267, 0
      %s270 = sadd.s32 %s269, 1
      %s271 = scalar_select %p268, %s269, %s270
      %p274 = pneg %p268
      %p275 = scmp.eq.s32.totalorder %s23, 1
      %p276 = por %p274, %p275
      %p277 = scmp.ne.s32.totalorder %s269, %s272
      %p278 = scmp.eq.s32.totalorder %s23, 0
      %p279 = por %p277, %p278
      %p280 = scmp.ne.s32.totalorder %s269, %s272
      %p281 = scmp.eq.s32.totalorder %s28, 1
      %p282 = por %p280, %p281
      %p283 = scmp.ne.s32.totalorder %s272, %s273
      %p284 = scmp.eq.s32.totalorder %s28, 0
      %p285 = por %p283, %p284
      %p286 = scmp.ne.s32.totalorder %s272, %s273
      %p287 = scmp.eq.s32.totalorder %s29, 1
      %p288 = por %p286, %p287
      %p290 = scmp.ne.s32.totalorder %s273, %s289
      %p291 = scmp.eq.s32.totalorder %s29, 0
      %p292 = por %p290, %p291
      %p293 = scmp.le.s32.totalorder 1, %s23
      %p294 = scmp.lt.s32.totalorder %s23, 3
      %p295 = pnand %p293, %p294
      %p296 = pneg %p295
      // Predicated region
      $region9: #{tpu_custom_call.1} parent=5 // pred_check
        _
      $region10: #{tpu_custom_call.1} parent=5 // pred_check_branch
        %298 = sbr.rel (%p295) target = $region12
      $region11: #{tpu_custom_call.1} parent=5 // pred_region
        %s299 = ssub.s32 %s23, 1
        // Predicated region
        $region13: #{tpu_custom_call.1} parent=11 // pred_check
          %p300 = pneg %p70
        $region14: #{tpu_custom_call.1} parent=11 // pred_check_branch
          %302 = sbr.rel (%p300) target = $region16
        $region15: #{tpu_custom_call.1} parent=11 // pred_region
          _
        $region16: #{tpu_custom_call.1} parent=11 // pred_fallthru
          _
        // Predicated region
        $region17: #{tpu_custom_call.1} parent=11 // pred_check
          %p303 = pneg %p91
        $region18: #{tpu_custom_call.1} parent=11 // pred_check_branch
          %305 = sbr.rel (%p303) target = $region20
        $region19: #{tpu_custom_call.1} parent=11 // pred_region
          _
        $region20: #{tpu_custom_call.1} parent=11 // pred_fallthru
          _
        // Predicated region
        $region21: #{tpu_custom_call.1} parent=11 // pred_check
          %p306 = pneg %p112
        $region22: #{tpu_custom_call.1} parent=11 // pred_check_branch
          %308 = sbr.rel (%p306) target = $region24
        $region23: #{tpu_custom_call.1} parent=11 // pred_region
          _
        $region24: #{tpu_custom_call.1} parent=11 // pred_fallthru
          _
        // Predicated region
        $region25: #{tpu_custom_call.1} parent=11 // pred_check
          %p309 = pneg %p133
        $region26: #{tpu_custom_call.1} parent=11 // pred_check_branch
          %311 = sbr.rel (%p309) target = $region28
        $region27: #{tpu_custom_call.1} parent=11 // pred_region
          _
        $region28: #{tpu_custom_call.1} parent=11 // pred_fallthru
          _
        // Predicated region
        $region29: #{tpu_custom_call.1} parent=11 // pred_check
          %p312 = pneg %p154
        $region30: #{tpu_custom_call.1} parent=11 // pred_check_branch
          %314 = sbr.rel (%p312) target = $region32
        $region31: #{tpu_custom_call.1} parent=11 // pred_region
          _
        $region32: #{tpu_custom_call.1} parent=11 // pred_fallthru
          _
        // Predicated region
        $region33: #{tpu_custom_call.1} parent=11 // pred_check
          %p315 = pneg %p175
        $region34: #{tpu_custom_call.1} parent=11 // pred_check_branch
          %317 = sbr.rel (%p315) target = $region36
        $region35: #{tpu_custom_call.1} parent=11 // pred_region
          _
        $region36: #{tpu_custom_call.1} parent=11 // pred_fallthru
          _
        // Predicated region
        $region37: #{tpu_custom_call.1} parent=11 // pred_check
          %p318 = pneg %p196
        $region38: #{tpu_custom_call.1} parent=11 // pred_check_branch
          %320 = sbr.rel (%p318) target = $region40
        $region39: #{tpu_custom_call.1} parent=11 // pred_region
          _
        $region40: #{tpu_custom_call.1} parent=11 // pred_fallthru
          _
        // Predicated region
        $region41: #{tpu_custom_call.1} parent=11 // pred_check
          %p321 = pneg %p217
        $region42: #{tpu_custom_call.1} parent=11 // pred_check_branch
          %323 = sbr.rel (%p321) target = $region44
        $region43: #{tpu_custom_call.1} parent=11 // pred_region
          _
        $region44: #{tpu_custom_call.1} parent=11 // pred_fallthru
          _
        // Predicated region
        $region45: #{tpu_custom_call.1} parent=11 // pred_check
          %p324 = pneg %p238
        $region46: #{tpu_custom_call.1} parent=11 // pred_check_branch
          %326 = sbr.rel (%p324) target = $region48
        $region47: #{tpu_custom_call.1} parent=11 // pred_region
          _
        $region48: #{tpu_custom_call.1} parent=11 // pred_fallthru
          _
        // Predicated region
        $region49: #{tpu_custom_call.1} parent=11 // pred_check
          %p327 = pneg %p259
        $region50: #{tpu_custom_call.1} parent=11 // pred_check_branch
          %329 = sbr.rel (%p327) target = $region52
        $region51: #{tpu_custom_call.1} parent=11 // pred_region
          _
        $region52: #{tpu_custom_call.1} parent=11 // pred_fallthru
          _
      $region12: #{tpu_custom_call.1} parent=5 // pred_fallthru
        _
      %p330 = scmp.lt.s32.totalorder %s23, 2
      // Predicated region
      $region53: #{tpu_custom_call.1} parent=5 // pred_check
        %p331 = pneg %p330
      $region54: #{tpu_custom_call.1} parent=5 // pred_check_branch
        %333 = sbr.rel (%p331) target = $region56
      $region55: #{tpu_custom_call.1} parent=5 // pred_region
        // Predicated region
        $region57: #{tpu_custom_call.1} parent=55 // pred_check
          %p334 = pneg %p43
        $region58: #{tpu_custom_call.1} parent=55 // pred_check_branch
          %336 = sbr.rel (%p334) target = $region60
        $region59: #{tpu_custom_call.1} parent=55 // pred_region
          %s337 = sand.u32 %s33, 1
          %s338 = scalar_lea.sflag [#allocation3], %s337
          %s339 = sand.u32 %s33, 1
          %s340 = smul.addr %s339, 8
          %s341 = scalar_lea.vmem [#allocation2], %s340
          %s343 = ssub.s32 128, 128
          %344 = vsyncadd %s338, %s343
          %s345 = smul.addr %s23, 128
          %s346 = scalar_lea.hbm %s0, %s345
          %s348 = sshll.u32 %s341, 4
          %s349 = int_to_ptr.vmem [resolvable:$true] %s348
          %351 = dma.hbm_to_vmem [thread:$0]  %s346, 128, %s349, %s338
        $region60: #{tpu_custom_call.1} parent=55 // pred_fallthru
          _
      $region56: #{tpu_custom_call.1} parent=5 // pred_fallthru
        _
      %p352 = scmp.le.s32.totalorder 1, %s23
      %p353 = scmp.lt.s32.totalorder %s23, 3
      %p354 = pnand %p352, %p353
      %p355 = pneg %p354
      // Predicated region
      $region61: #{tpu_custom_call.1} parent=5 // pred_check
        _
      $region62: #{tpu_custom_call.1} parent=5 // pred_check_branch
        %357 = sbr.rel (%p354) target = $region64
      $region63: #{tpu_custom_call.1} parent=5 // pred_region
        %s358 = ssub.s32 %s23, 1
        %s359 = sand.u32 %s36, 1
        %s360 = scalar_lea.sflag [#allocation3], %s359
        %s361 = sand.u32 %s36, 1
        %s362 = smul.addr %s361, 8
        %s363 = scalar_lea.vmem [#allocation2], %s362
        // Predicated region
        $region65: #{tpu_custom_call.1} parent=63 // pred_check
          %p364 = pneg %p49
        $region66: #{tpu_custom_call.1} parent=63 // pred_check_branch
          %366 = sbr.rel (%p364) target = $region68
        $region67: #{tpu_custom_call.1} parent=63 // pred_region
          %367 = dma.done %s360, 128
        $region68: #{tpu_custom_call.1} parent=63 // pred_fallthru
          _
        %s368 = sand.u32 %s36, 1
        %s369 = scalar_lea.sflag [#allocation3], %s368
        %s370 = sand.u32 %s36, 1
        %s371 = smul.addr %s370, 8
        %s372 = scalar_lea.vmem [#allocation2], %s371
        %p373 = pneg %p49
        %p374 = pneg %p46
        %p375 = pneg %p70
        %p376 = pneg %p67
        %p377 = pneg %p91
        %p378 = pneg %p88
        %p379 = pneg %p112
        %p380 = pneg %p109
        %p381 = pneg %p133
        %p382 = pneg %p130
        %p383 = pneg %p154
        %p384 = pneg %p151
        %p385 = pneg %p175
        %p386 = pneg %p172
        %p387 = pneg %p196
        %p388 = pneg %p193
        %p389 = pneg %p217
        %p390 = pneg %p214
        %p391 = pneg %p238
        %p392 = pneg %p235
        %p393 = pneg %p259
        %p394 = pneg %p256
        %p395 = pneg %p285
        %p396 = pneg %p282
        %s397 = sand.u32 %s272, 1
        %s398 = scalar_lea.sflag [#allocation4], %s397
        %s399 = sand.u32 %s272, 1
        %s400 = smul.addr %s399, 8
        %s401 = scalar_lea.vmem [#allocation5], %s400
        %v402 = vld [vmem:[%s363] sm:$0xff]
        %v403 = vld [vmem:[%s1] sm:$0xff]
        %v404 = vld [vmem:[%s1 + $0x8] sm:$0xff]
        %v405 = vld [vmem:[%s1 + $0x10] sm:$0xff]
        %v406 = vld [vmem:[%s1 + $0x18] sm:$0xff]
        %v407 = vld [vmem:[%s4] sm:$0x1]
        %v408 = vld [vmem:[%s2] sm:$0xff]
        %v409 = vld [vmem:[%s2 + $0x8] sm:$0xff]
        %v410 = vld [vmem:[%s2 + $0x10] sm:$0xff]
        %v411 = vld [vmem:[%s2 + $0x18] sm:$0xff]
        %v412 = vld [vmem:[%s5] sm:$0x1]
        %v413 = vld [vmem:[%s3] sm:$0xff]
        %v414 = vld [vmem:[%s3 + $0x8] sm:$0xff]
        %v415 = vld [vmem:[%s3 + $0x10] sm:$0xff]
        %v416 = vld [vmem:[%s3 + $0x18] sm:$0xff]
        %v417 = vld [vmem:[%s6] sm:$0x1]
        %v418 = vld [vmem:[%s8] sm:$0x1]
        %v419 = vld [vmem:[%s9] sm:$0x1]
        %v420 = vld [vmem:[%s10] sm:$0x1]
        %v422 = vlaneseq
        %v423 = vshrl.u32 %v422, 7
        %v424 = vsub.s32 0, %v423
        %v425 = vrot.slane %v407, %v424
        %vm427 = vcmask 261120
        %v429 = vsel %vm427, %v402, 0
        %431 = vmatprep.subr.mxu0 0.0
        %432 = vmatpush1.msra.mxu0 %v403
        %433 = vmatprep.subr.mxu0 0.0
        %434 = vmatpush1.msra.mxu0 %v404
        %435 = vmatprep.subr.mxu0 0.0
        %436 = vmatpush1.msra.mxu0 %v405
        %437 = vmatprep.subr.mxu0 0.0
        %438 = vmatpush1.msra.mxu0 %v406
        %439 = vmatprep.subr.mxu0 0.0
        %440 = vmatpush1.msra.mxu0 0.0
        %441 = vmatprep.subr.mxu0 0.0
        %442 = vmatpush1.msra.mxu0 0.0
        %443 = vmatprep.subr.mxu0 0.0
        %444 = vmatpush1.msra.mxu0 0.0
        %445 = vmatprep.subr.mxu0 0.0
        %446 = vmatpush1.msra.mxu0 0.0
        %447 = vmatprep.subr.mxu0 0.0
        %448 = vmatpush1.msra.mxu0 0.0
        %449 = vmatprep.subr.mxu0 0.0
        %450 = vmatpush1.msra.mxu0 0.0
        %451 = vmatprep.subr.mxu0 0.0
        %452 = vmatpush1.msra.mxu0 0.0
        %453 = vmatprep.subr.mxu0 0.0
        %454 = vmatpush1.msra.mxu0 0.0
        %455 = vmatprep.subr.mxu0 0.0
        %456 = vmatpush1.msra.mxu0 0.0
        %457 = vmatprep.subr.mxu0 0.0
        %458 = vmatpush1.msra.mxu0 0.0
        %459 = vmatprep.subr.mxu0 0.0
        %460 = vmatpush1.msra.mxu0 0.0
        %461 = vmatprep.subr.mxu0 0.0
        %462 = vmatpush1.msra.mxu0 0.0
        %463 = vmatprep.subr.mxu0 0.0
        %464 = vmatpush1.msra.mxu0 0.0
        %465 = vmatprep.subr.mxu0 0.0
        %466 = vmatpush1.msra.mxu0 0.0
        %467 = vmatprep.subr.mxu0 0.0
        %468 = vmatpush1.msra.mxu0 0.0
        %469 = vmatprep.subr.mxu0 0.0
        %470 = vmatpush1.msra.mxu0 0.0
        %471 = vmatprep.subr.mxu0 0.0
        %472 = vmatpush1.msra.mxu0 0.0
        %473 = vmatprep.subr.mxu0 0.0
        %474 = vmatpush1.msra.mxu0 0.0
        %475 = vmatprep.subr.mxu0 0.0
        %476 = vmatpush1.msra.mxu0 0.0
        %477 = vmatprep.subr.mxu0 0.0
        %478 = vmatpush1.msra.mxu0 0.0
        %479 = vmatprep.subr.mxu0 0.0
        %480 = vmatpush1.msra.mxu0 0.0
        %481 = vmatprep.subr.mxu0 0.0
        %482 = vmatpush1.msra.mxu0 0.0
        %483 = vmatprep.subr.mxu0 0.0
        %484 = vmatpush1.msra.mxu0 0.0
        %485 = vmatprep.subr.mxu0 0.0
        %486 = vmatpush1.msra.mxu0 0.0
        %487 = vmatprep.subr.mxu0 0.0
        %488 = vmatpush1.msra.mxu0 0.0
        %489 = vmatprep.subr.mxu0 0.0
        %490 = vmatpush1.msra.mxu0 0.0
        %491 = vmatprep.subr.mxu0 0.0
        %492 = vmatpush1.msra.mxu0 0.0
        %493 = vmatprep.subr.mxu0 0.0
        %494 = vmatpush1.msra.mxu0 0.0
        %495 = vmatprep.mubr.f32.mxu0 0.0
        %496 = vmatmul.mubr.f32.gmra.mrb[0].mxu0 %v429
        %v497 = vpop.f32.mrb[0].mxu0
        %v498 = vadd.f32 %v425, %v497
        %v499 = vpop.f32.mrb[0].mxu0
        %500 = vdwg.mxu0
        %v502 = vlaneseq
        %v503 = vshrl.u32 %v502, 7
        %v504 = vsub.s32 0, %v503
        %v505 = vrot.slane %v412, %v504
        %507 = vmatprep.subr.mxu0 0.0
        %508 = vmatpush1.msra.mxu0 %v408
        %509 = vmatprep.subr.mxu0 0.0
        %510 = vmatpush1.msra.mxu0 %v409
        %511 = vmatprep.subr.mxu0 0.0
        %512 = vmatpush1.msra.mxu0 %v410
        %513 = vmatprep.subr.mxu0 0.0
        %514 = vmatpush1.msra.mxu0 %v411
        %515 = vmatprep.subr.mxu0 0.0
        %516 = vmatpush1.msra.mxu0 0.0
        %517 = vmatprep.subr.mxu0 0.0
        %518 = vmatpush1.msra.mxu0 0.0
        %519 = vmatprep.subr.mxu0 0.0
        %520 = vmatpush1.msra.mxu0 0.0
        %521 = vmatprep.subr.mxu0 0.0
        %522 = vmatpush1.msra.mxu0 0.0
        %523 = vmatprep.subr.mxu0 0.0
        %524 = vmatpush1.msra.mxu0 0.0
        %525 = vmatprep.subr.mxu0 0.0
        %526 = vmatpush1.msra.mxu0 0.0
        %527 = vmatprep.subr.mxu0 0.0
        %528 = vmatpush1.msra.mxu0 0.0
        %529 = vmatprep.subr.mxu0 0.0
        %530 = vmatpush1.msra.mxu0 0.0
        %531 = vmatprep.subr.mxu0 0.0
        %532 = vmatpush1.msra.mxu0 0.0
        %533 = vmatprep.subr.mxu0 0.0
        %534 = vmatpush1.msra.mxu0 0.0
        %535 = vmatprep.subr.mxu0 0.0
        %536 = vmatpush1.msra.mxu0 0.0
        %537 = vmatprep.subr.mxu0 0.0
        %538 = vmatpush1.msra.mxu0 0.0
        %539 = vmatprep.subr.mxu0 0.0
        %540 = vmatpush1.msra.mxu0 0.0
        %541 = vmatprep.subr.mxu0 0.0
        %542 = vmatpush1.msra.mxu0 0.0
        %543 = vmatprep.subr.mxu0 0.0
        %544 = vmatpush1.msra.mxu0 0.0
        %545 = vmatprep.subr.mxu0 0.0
        %546 = vmatpush1.msra.mxu0 0.0
        %547 = vmatprep.subr.mxu0 0.0
        %548 = vmatpush1.msra.mxu0 0.0
        %549 = vmatprep.subr.mxu0 0.0
        %550 = vmatpush1.msra.mxu0 0.0
        %551 = vmatprep.subr.mxu0 0.0
        %552 = vmatpush1.msra.mxu0 0.0
        %553 = vmatprep.subr.mxu0 0.0
        %554 = vmatpush1.msra.mxu0 0.0
        %555 = vmatprep.subr.mxu0 0.0
        %556 = vmatpush1.msra.mxu0 0.0
        %557 = vmatprep.subr.mxu0 0.0
        %558 = vmatpush1.msra.mxu0 0.0
        %559 = vmatprep.subr.mxu0 0.0
        %560 = vmatpush1.msra.mxu0 0.0
        %561 = vmatprep.subr.mxu0 0.0
        %562 = vmatpush1.msra.mxu0 0.0
        %563 = vmatprep.subr.mxu0 0.0
        %564 = vmatpush1.msra.mxu0 0.0
        %565 = vmatprep.subr.mxu0 0.0
        %566 = vmatpush1.msra.mxu0 0.0
        %567 = vmatprep.subr.mxu0 0.0
        %568 = vmatpush1.msra.mxu0 0.0
        %569 = vmatprep.subr.mxu0 0.0
        %570 = vmatpush1.msra.mxu0 0.0
        %571 = vmatprep.mubr.f32.mxu0 0.0
        %572 = vmatmul.mubr.f32.gmra.mrb[0].mxu0 %v429
        %v573 = vpop.f32.mrb[0].mxu0
        %v574 = vadd.f32 %v505, %v573
        %v575 = vpop.f32.mrb[0].mxu0
        %576 = vdwg.mxu0
        %v578 = vlaneseq
        %v579 = vshrl.u32 %v578, 7
        %v580 = vsub.s32 0, %v579
        %v581 = vrot.slane %v417, %v580
        %583 = vmatprep.subr.mxu0 0.0
        %584 = vmatpush1.msra.mxu0 %v413
        %585 = vmatprep.subr.mxu0 0.0
        %586 = vmatpush1.msra.mxu0 %v414
        %587 = vmatprep.subr.mxu0 0.0
        %588 = vmatpush1.msra.mxu0 %v415
        %589 = vmatprep.subr.mxu0 0.0
        %590 = vmatpush1.msra.mxu0 %v416
        %591 = vmatprep.subr.mxu0 0.0
        %592 = vmatpush1.msra.mxu0 0.0
        %593 = vmatprep.subr.mxu0 0.0
        %594 = vmatpush1.msra.mxu0 0.0
        %595 = vmatprep.subr.mxu0 0.0
        %596 = vmatpush1.msra.mxu0 0.0
        %597 = vmatprep.subr.mxu0 0.0
        %598 = vmatpush1.msra.mxu0 0.0
        %599 = vmatprep.subr.mxu0 0.0
        %600 = vmatpush1.msra.mxu0 0.0
        %601 = vmatprep.subr.mxu0 0.0
        %602 = vmatpush1.msra.mxu0 0.0
        %603 = vmatprep.subr.mxu0 0.0
        %604 = vmatpush1.msra.mxu0 0.0
        %605 = vmatprep.subr.mxu0 0.0
        %606 = vmatpush1.msra.mxu0 0.0
        %607 = vmatprep.subr.mxu0 0.0
        %608 = vmatpush1.msra.mxu0 0.0
        %609 = vmatprep.subr.mxu0 0.0
        %610 = vmatpush1.msra.mxu0 0.0
        %611 = vmatprep.subr.mxu0 0.0
        %612 = vmatpush1.msra.mxu0 0.0
        %613 = vmatprep.subr.mxu0 0.0
        %614 = vmatpush1.msra.mxu0 0.0
        %615 = vmatprep.subr.mxu0 0.0
        %616 = vmatpush1.msra.mxu0 0.0
        %617 = vmatprep.subr.mxu0 0.0
        %618 = vmatpush1.msra.mxu0 0.0
        %619 = vmatprep.subr.mxu0 0.0
        %620 = vmatpush1.msra.mxu0 0.0
        %621 = vmatprep.subr.mxu0 0.0
        %622 = vmatpush1.msra.mxu0 0.0
        %623 = vmatprep.subr.mxu0 0.0
        %624 = vmatpush1.msra.mxu0 0.0
        %625 = vmatprep.subr.mxu0 0.0
        %626 = vmatpush1.msra.mxu0 0.0
        %627 = vmatprep.subr.mxu0 0.0
        %628 = vmatpush1.msra.mxu0 0.0
        %629 = vmatprep.subr.mxu0 0.0
        %630 = vmatpush1.msra.mxu0 0.0
        %631 = vmatprep.subr.mxu0 0.0
        %632 = vmatpush1.msra.mxu0 0.0
        %633 = vmatprep.subr.mxu0 0.0
        %634 = vmatpush1.msra.mxu0 0.0
        %635 = vmatprep.subr.mxu0 0.0
        %636 = vmatpush1.msra.mxu0 0.0
        %637 = vmatprep.subr.mxu0 0.0
        %638 = vmatpush1.msra.mxu0 0.0
        %639 = vmatprep.subr.mxu0 0.0
        %640 = vmatpush1.msra.mxu0 0.0
        %641 = vmatprep.subr.mxu0 0.0
        %642 = vmatpush1.msra.mxu0 0.0
        %643 = vmatprep.subr.mxu0 0.0
        %644 = vmatpush1.msra.mxu0 0.0
        %645 = vmatprep.subr.mxu0 0.0
        %646 = vmatpush1.msra.mxu0 0.0
        %647 = vmatprep.mubr.f32.mxu0 0.0
        %648 = vmatmul.mubr.f32.gmra.mrb[0].mxu0 %v429
        %v649 = vpop.f32.mrb[0].mxu0
        %v650 = vadd.f32 %v581, %v649
        %v651 = vpop.f32.mrb[0].mxu0
        %652 = vdwg.mxu0
        %v653 = vlaneseq
        %v654 = vshrl.u32 %v653, 7
        %v655 = vlaneseq
        %v656 = vand.u32 %v655, 127
        %vm657 = vcmp.le.s32.totalorder %v656, %v654
        %v658 = vsel %vm657, 1, 0
        %v659 = vcvt.s32.f32 %v658
        %v661 = vlaneseq
        %v662 = vshrl.u32 %v661, 7
        %v663 = vsub.s32 0, %v662
        %v664 = vrot.slane %v418, %v663
        %v666 = vadd.f32 %v664, 0.0
        %v668 = vsel %vm427, %v498, 0
        %v671 = vsel %vm427, %v574, 0
        %673 = vmatprep.subr.mxu0 0.0
        %674 = vmatpush1.xpose.msra.mxu0 %v671
        %675 = vmatprep.subr.mxu0 0.0
        %676 = vmatpush1.xpose.msra.mxu0 0.0
        %677 = vmatprep.subr.mxu0 0.0
        %678 = vmatpush1.xpose.msra.mxu0 0.0
        %679 = vmatprep.subr.mxu0 0.0
        %680 = vmatpush1.xpose.msra.mxu0 0.0
        %681 = vmatprep.subr.mxu0 0.0
        %682 = vmatpush1.xpose.msra.mxu0 0.0
        %683 = vmatprep.subr.mxu0 0.0
        %684 = vmatpush1.xpose.msra.mxu0 0.0
        %685 = vmatprep.subr.mxu0 0.0
        %686 = vmatpush1.xpose.msra.mxu0 0.0
        %687 = vmatprep.subr.mxu0 0.0
        %688 = vmatpush1.xpose.msra.mxu0 0.0
        %689 = vmatprep.subr.mxu0 0.0
        %690 = vmatpush1.xpose.msra.mxu0 0.0
        %691 = vmatprep.subr.mxu0 0.0
        %692 = vmatpush1.xpose.msra.mxu0 0.0
        %693 = vmatprep.subr.mxu0 0.0
        %694 = vmatpush1.xpose.msra.mxu0 0.0
        %695 = vmatprep.subr.mxu0 0.0
        %696 = vmatpush1.xpose.msra.mxu0 0.0
        %697 = vmatprep.subr.mxu0 0.0
        %698 = vmatpush1.xpose.msra.mxu0 0.0
        %699 = vmatprep.subr.mxu0 0.0
        %700 = vmatpush1.xpose.msra.mxu0 0.0
        %701 = vmatprep.subr.mxu0 0.0
        %702 = vmatpush1.xpose.msra.mxu0 0.0
        %703 = vmatprep.subr.mxu0 0.0
        %704 = vmatpush1.xpose.msra.mxu0 0.0
        %705 = vmatprep.subr.mxu0 0.0
        %706 = vmatpush1.xpose.msra.mxu0 0.0
        %707 = vmatprep.subr.mxu0 0.0
        %708 = vmatpush1.xpose.msra.mxu0 0.0
        %709 = vmatprep.subr.mxu0 0.0
        %710 = vmatpush1.xpose.msra.mxu0 0.0
        %711 = vmatprep.subr.mxu0 0.0
        %712 = vmatpush1.xpose.msra.mxu0 0.0
        %713 = vmatprep.subr.mxu0 0.0
        %714 = vmatpush1.xpose.msra.mxu0 0.0
        %715 = vmatprep.subr.mxu0 0.0
        %716 = vmatpush1.xpose.msra.mxu0 0.0
        %717 = vmatprep.subr.mxu0 0.0
        %718 = vmatpush1.xpose.msra.mxu0 0.0
        %719 = vmatprep.subr.mxu0 0.0
        %720 = vmatpush1.xpose.msra.mxu0 0.0
        %721 = vmatprep.subr.mxu0 0.0
        %722 = vmatpush1.xpose.msra.mxu0 0.0
        %723 = vmatprep.subr.mxu0 0.0
        %724 = vmatpush1.xpose.msra.mxu0 0.0
        %725 = vmatprep.subr.mxu0 0.0
        %726 = vmatpush1.xpose.msra.mxu0 0.0
        %727 = vmatprep.subr.mxu0 0.0
        %728 = vmatpush1.xpose.msra.mxu0 0.0
        %729 = vmatprep.subr.mxu0 0.0
        %730 = vmatpush1.xpose.msra.mxu0 0.0
        %731 = vmatprep.subr.mxu0 0.0
        %732 = vmatpush1.xpose.msra.mxu0 0.0
        %733 = vmatprep.subr.mxu0 0.0
        %734 = vmatpush1.xpose.msra.mxu0 0.0
        %735 = vmatprep.subr.mxu0 0.0
        %736 = vmatpush1.xpose.msra.mxu0 0.0
        %737 = vmatprep.mubr.f32.mxu0 0.0
        %738 = vmatmul.mubr.f32.gmra.mrb[0].mxu0 %v668
        %v739 = vpop.f32.mrb[0].mxu0
        %v740 = vadd.f32 0.0, %v739
        %v741 = vpop.f32.mrb[0].mxu0
        %742 = vdwg.mxu0
        %v743 = vmul.f32 %v740, 0.17677669
        %v744 = vmul.f32 %v743, %v659
        %vm745 = vcmask 64512
        %v746 = vsel %vm745, %v744, -inf
        %747 = vmax.xlane.f32.xlu0 %v746
        %v748 = vpop.xlane.xlu0 %747
        %v749 = vsub.f32 %v744, %v748
        %v750 = vmul.f32 %v749, 1.442695
        %v751 = vpow.pop %v750
        %v752 = vsel %vm745, %v751, 0.0
        %753 = vadd.xlane.f32.xlu0 %v752
        %v754 = vpop.xlane.xlu0 %753
        %v755 = vrcp.pop %v754
        %v756 = vmul.f32 %v751, %v755
        %v758 = vsel %vm745, %v756, 0
        %760 = vmatprep.subr.mxu0 0.0
        %761 = vmatpush1.msra.mxu0 %v650
        %762 = vmatprep.subr.mxu0 0.0
        %763 = vmatpush1.msra.mxu0 0.0
        %764 = vmatprep.subr.mxu0 0.0
        %765 = vmatpush1.msra.mxu0 0.0
        %766 = vmatprep.subr.mxu0 0.0
        %767 = vmatpush1.msra.mxu0 0.0
        %768 = vmatprep.subr.mxu0 0.0
        %769 = vmatpush1.msra.mxu0 0.0
        %770 = vmatprep.subr.mxu0 0.0
        %771 = vmatpush1.msra.mxu0 0.0
        %772 = vmatprep.subr.mxu0 0.0
        %773 = vmatpush1.msra.mxu0 0.0
        %774 = vmatprep.subr.mxu0 0.0
        %775 = vmatpush1.msra.mxu0 0.0
        %776 = vmatprep.subr.mxu0 0.0
        %777 = vmatpush1.msra.mxu0 0.0
        %778 = vmatprep.subr.mxu0 0.0
        %779 = vmatpush1.msra.mxu0 0.0
        %780 = vmatprep.subr.mxu0 0.0
        %781 = vmatpush1.msra.mxu0 0.0
        %782 = vmatprep.subr.mxu0 0.0
        %783 = vmatpush1.msra.mxu0 0.0
        %784 = vmatprep.subr.mxu0 0.0
        %785 = vmatpush1.msra.mxu0 0.0
        %786 = vmatprep.subr.mxu0 0.0
        %787 = vmatpush1.msra.mxu0 0.0
        %788 = vmatprep.subr.mxu0 0.0
        %789 = vmatpush1.msra.mxu0 0.0
        %790 = vmatprep.subr.mxu0 0.0
        %791 = vmatpush1.msra.mxu0 0.0
        %792 = vmatprep.subr.mxu0 0.0
        %793 = vmatpush1.msra.mxu0 0.0
        %794 = vmatprep.subr.mxu0 0.0
        %795 = vmatpush1.msra.mxu0 0.0
        %796 = vmatprep.subr.mxu0 0.0
        %797 = vmatpush1.msra.mxu0 0.0
        %798 = vmatprep.subr.mxu0 0.0
        %799 = vmatpush1.msra.mxu0 0.0
        %800 = vmatprep.subr.mxu0 0.0
        %801 = vmatpush1.msra.mxu0 0.0
        %802 = vmatprep.subr.mxu0 0.0
        %803 = vmatpush1.msra.mxu0 0.0
        %804 = vmatprep.subr.mxu0 0.0
        %805 = vmatpush1.msra.mxu0 0.0
        %806 = vmatprep.subr.mxu0 0.0
        %807 = vmatpush1.msra.mxu0 0.0
        %808 = vmatprep.subr.mxu0 0.0
        %809 = vmatpush1.msra.mxu0 0.0
        %810 = vmatprep.subr.mxu0 0.0
        %811 = vmatpush1.msra.mxu0 0.0
        %812 = vmatprep.subr.mxu0 0.0
        %813 = vmatpush1.msra.mxu0 0.0
        %814 = vmatprep.subr.mxu0 0.0
        %815 = vmatpush1.msra.mxu0 0.0
        %816 = vmatprep.subr.mxu0 0.0
        %817 = vmatpush1.msra.mxu0 0.0
        %818 = vmatprep.subr.mxu0 0.0
        %819 = vmatpush1.msra.mxu0 0.0
        %820 = vmatprep.subr.mxu0 0.0
        %821 = vmatpush1.msra.mxu0 0.0
        %822 = vmatprep.subr.mxu0 0.0
        %823 = vmatpush1.msra.mxu0 0.0
        %824 = vmatprep.mubr.f32.mxu0 0.0
        %825 = vmatmul.mubr.f32.gmra.mrb[0].mxu0 %v758
        %v826 = vpop.f32.mrb[0].mxu0
        %v827 = vadd.f32 0.0, %v826
        %v828 = vpop.f32.mrb[0].mxu0
        %829 = vdwg.mxu0
        %v830 = vld [vmem:[%s7] sm:$0xff]
        %v831 = vld [vmem:[%s7 + $0x8] sm:$0xff]
        %v832 = vld [vmem:[%s7 + $0x10] sm:$0xff]
        %v833 = vld [vmem:[%s7 + $0x18] sm:$0xff]
        %v835 = vsel %vm427, %v827, 0
        %837 = vmatprep.subr.mxu0 0.0
        %838 = vmatpush1.msra.mxu0 %v830
        %839 = vmatprep.subr.mxu0 0.0
        %840 = vmatpush1.msra.mxu0 %v831
        %841 = vmatprep.subr.mxu0 0.0
        %842 = vmatpush1.msra.mxu0 %v832
        %843 = vmatprep.subr.mxu0 0.0
        %844 = vmatpush1.msra.mxu0 %v833
        %845 = vmatprep.subr.mxu0 0.0
        %846 = vmatpush1.msra.mxu0 0.0
        %847 = vmatprep.subr.mxu0 0.0
        %848 = vmatpush1.msra.mxu0 0.0
        %849 = vmatprep.subr.mxu0 0.0
        %850 = vmatpush1.msra.mxu0 0.0
        %851 = vmatprep.subr.mxu0 0.0
        %852 = vmatpush1.msra.mxu0 0.0
        %853 = vmatprep.subr.mxu0 0.0
        %854 = vmatpush1.msra.mxu0 0.0
        %855 = vmatprep.subr.mxu0 0.0
        %856 = vmatpush1.msra.mxu0 0.0
        %857 = vmatprep.subr.mxu0 0.0
        %858 = vmatpush1.msra.mxu0 0.0
        %859 = vmatprep.subr.mxu0 0.0
        %860 = vmatpush1.msra.mxu0 0.0
        %861 = vmatprep.subr.mxu0 0.0
        %862 = vmatpush1.msra.mxu0 0.0
        %863 = vmatprep.subr.mxu0 0.0
        %864 = vmatpush1.msra.mxu0 0.0
        %865 = vmatprep.subr.mxu0 0.0
        %866 = vmatpush1.msra.mxu0 0.0
        %867 = vmatprep.subr.mxu0 0.0
        %868 = vmatpush1.msra.mxu0 0.0
        %869 = vmatprep.subr.mxu0 0.0
        %870 = vmatpush1.msra.mxu0 0.0
        %871 = vmatprep.subr.mxu0 0.0
        %872 = vmatpush1.msra.mxu0 0.0
        %873 = vmatprep.subr.mxu0 0.0
        %874 = vmatpush1.msra.mxu0 0.0
        %875 = vmatprep.subr.mxu0 0.0
        %876 = vmatpush1.msra.mxu0 0.0
        %877 = vmatprep.subr.mxu0 0.0
        %878 = vmatpush1.msra.mxu0 0.0
        %879 = vmatprep.subr.mxu0 0.0
        %880 = vmatpush1.msra.mxu0 0.0
        %881 = vmatprep.subr.mxu0 0.0
        %882 = vmatpush1.msra.mxu0 0.0
        %883 = vmatprep.subr.mxu0 0.0
        %884 = vmatpush1.msra.mxu0 0.0
        %885 = vmatprep.subr.mxu0 0.0
        %886 = vmatpush1.msra.mxu0 0.0
        %887 = vmatprep.subr.mxu0 0.0
        %888 = vmatpush1.msra.mxu0 0.0
        %889 = vmatprep.subr.mxu0 0.0
        %890 = vmatpush1.msra.mxu0 0.0
        %891 = vmatprep.subr.mxu0 0.0
        %892 = vmatpush1.msra.mxu0 0.0
        %893 = vmatprep.subr.mxu0 0.0
        %894 = vmatpush1.msra.mxu0 0.0
        %895 = vmatprep.subr.mxu0 0.0
        %896 = vmatpush1.msra.mxu0 0.0
        %897 = vmatprep.subr.mxu0 0.0
        %898 = vmatpush1.msra.mxu0 0.0
        %899 = vmatprep.subr.mxu0 0.0
        %900 = vmatpush1.msra.mxu0 0.0
        %901 = vmatprep.mubr.f32.mxu0 0.0
        %902 = vmatmul.mubr.f32.gmra.mrb[0].mxu0 %v835
        %v903 = vpop.f32.mrb[0].mxu0
        %v904 = vadd.f32 0.0, %v903
        %v905 = vpop.f32.mrb[0].mxu0
        %906 = vdwg.mxu0
        %v907 = vadd.f32 %v666, %v904
        %908 = vrot.lane.b32.xlu0 %v498, 96
        %v909 = vpop.permute.xlu0 %908
        %910 = vrot.lane.b32.xlu0 %v574, 96
        %v911 = vpop.permute.xlu0 %910
        %v912 = vsel %vm427, %v909, 0
        %v914 = vsel %vm427, %v911, 0
        %916 = vmatprep.subr.mxu0 0.0
        %917 = vmatpush1.xpose.msra.mxu0 %v914
        %918 = vmatprep.subr.mxu0 0.0
        %919 = vmatpush1.xpose.msra.mxu0 0.0
        %920 = vmatprep.subr.mxu0 0.0
        %921 = vmatpush1.xpose.msra.mxu0 0.0
        %922 = vmatprep.subr.mxu0 0.0
        %923 = vmatpush1.xpose.msra.mxu0 0.0
        %924 = vmatprep.subr.mxu0 0.0
        %925 = vmatpush1.xpose.msra.mxu0 0.0
        %926 = vmatprep.subr.mxu0 0.0
        %927 = vmatpush1.xpose.msra.mxu0 0.0
        %928 = vmatprep.subr.mxu0 0.0
        %929 = vmatpush1.xpose.msra.mxu0 0.0
        %930 = vmatprep.subr.mxu0 0.0
        %931 = vmatpush1.xpose.msra.mxu0 0.0
        %932 = vmatprep.subr.mxu0 0.0
        %933 = vmatpush1.xpose.msra.mxu0 0.0
        %934 = vmatprep.subr.mxu0 0.0
        %935 = vmatpush1.xpose.msra.mxu0 0.0
        %936 = vmatprep.subr.mxu0 0.0
        %937 = vmatpush1.xpose.msra.mxu0 0.0
        %938 = vmatprep.subr.mxu0 0.0
        %939 = vmatpush1.xpose.msra.mxu0 0.0
        %940 = vmatprep.subr.mxu0 0.0
        %941 = vmatpush1.xpose.msra.mxu0 0.0
        %942 = vmatprep.subr.mxu0 0.0
        %943 = vmatpush1.xpose.msra.mxu0 0.0
        %944 = vmatprep.subr.mxu0 0.0
        %945 = vmatpush1.xpose.msra.mxu0 0.0
        %946 = vmatprep.subr.mxu0 0.0
        %947 = vmatpush1.xpose.msra.mxu0 0.0
        %948 = vmatprep.subr.mxu0 0.0
        %949 = vmatpush1.xpose.msra.mxu0 0.0
        %950 = vmatprep.subr.mxu0 0.0
        %951 = vmatpush1.xpose.msra.mxu0 0.0
        %952 = vmatprep.subr.mxu0 0.0
        %953 = vmatpush1.xpose.msra.mxu0 0.0
        %954 = vmatprep.subr.mxu0 0.0
        %955 = vmatpush1.xpose.msra.mxu0 0.0
        %956 = vmatprep.subr.mxu0 0.0
        %957 = vmatpush1.xpose.msra.mxu0 0.0
        %958 = vmatprep.subr.mxu0 0.0
        %959 = vmatpush1.xpose.msra.mxu0 0.0
        %960 = vmatprep.subr.mxu0 0.0
        %961 = vmatpush1.xpose.msra.mxu0 0.0
        %962 = vmatprep.subr.mxu0 0.0
        %963 = vmatpush1.xpose.msra.mxu0 0.0
        %964 = vmatprep.subr.mxu0 0.0
        %965 = vmatpush1.xpose.msra.mxu0 0.0
        %966 = vmatprep.subr.mxu0 0.0
        %967 = vmatpush1.xpose.msra.mxu0 0.0
        %968 = vmatprep.subr.mxu0 0.0
        %969 = vmatpush1.xpose.msra.mxu0 0.0
        %970 = vmatprep.subr.mxu0 0.0
        %971 = vmatpush1.xpose.msra.mxu0 0.0
        %972 = vmatprep.subr.mxu0 0.0
        %973 = vmatpush1.xpose.msra.mxu0 0.0
        %974 = vmatprep.subr.mxu0 0.0
        %975 = vmatpush1.xpose.msra.mxu0 0.0
        %976 = vmatprep.subr.mxu0 0.0
        %977 = vmatpush1.xpose.msra.mxu0 0.0
        %978 = vmatprep.subr.mxu0 0.0
        %979 = vmatpush1.xpose.msra.mxu0 0.0
        %980 = vmatprep.mubr.f32.mxu0 0.0
        %981 = vmatmul.mubr.f32.gmra.mrb[0].mxu0 %v912
        %v982 = vpop.f32.mrb[0].mxu0
        %v983 = vadd.f32 0.0, %v982
        %v984 = vpop.f32.mrb[0].mxu0
        %985 = vdwg.mxu0
        %v986 = vmul.f32 %v983, 0.17677669
        %v987 = vmul.f32 %v986, %v659
        %v988 = vsel %vm745, %v987, -inf
        %989 = vmax.xlane.f32.xlu0 %v988
        %v990 = vpop.xlane.xlu0 %989
        %v991 = vsub.f32 %v987, %v990
        %v992 = vmul.f32 %v991, 1.442695
        %v993 = vpow.pop %v992
        %v994 = vsel %vm745, %v993, 0.0
        %995 = vadd.xlane.f32.xlu0 %v994
        %v996 = vpop.xlane.xlu0 %995
        %v997 = vrcp.pop %v996
        %v998 = vmul.f32 %v993, %v997
        %1000 = vrot.lane.b32.xlu0 %v650, 96
        %v1001 = vpop.permute.xlu0 %1000
        %v1004 = vsel %vm745, %v998, 0
        %1006 = vmatprep.subr.mxu0 0.0
        %1007 = vmatpush1.msra.mxu0 %v1001
        %1008 = vmatprep.subr.mxu0 0.0
        %1009 = vmatpush1.msra.mxu0 0.0
        %1010 = vmatprep.subr.mxu0 0.0
        %1011 = vmatpush1.msra.mxu0 0.0
        %1012 = vmatprep.subr.mxu0 0.0
        %1013 = vmatpush1.msra.mxu0 0.0
        %1014 = vmatprep.subr.mxu0 0.0
        %1015 = vmatpush1.msra.mxu0 0.0
        %1016 = vmatprep.subr.mxu0 0.0
        %1017 = vmatpush1.msra.mxu0 0.0
        %1018 = vmatprep.subr.mxu0 0.0
        %1019 = vmatpush1.msra.mxu0 0.0
        %1020 = vmatprep.subr.mxu0 0.0
        %1021 = vmatpush1.msra.mxu0 0.0
        %1022 = vmatprep.subr.mxu0 0.0
        %1023 = vmatpush1.msra.mxu0 0.0
        %1024 = vmatprep.subr.mxu0 0.0
        %1025 = vmatpush1.msra.mxu0 0.0
        %1026 = vmatprep.subr.mxu0 0.0
        %1027 = vmatpush1.msra.mxu0 0.0
        %1028 = vmatprep.subr.mxu0 0.0
        %1029 = vmatpush1.msra.mxu0 0.0
        %1030 = vmatprep.subr.mxu0 0.0
        %1031 = vmatpush1.msra.mxu0 0.0
        %1032 = vmatprep.subr.mxu0 0.0
        %1033 = vmatpush1.msra.mxu0 0.0
        %1034 = vmatprep.subr.mxu0 0.0
        %1035 = vmatpush1.msra.mxu0 0.0
        %1036 = vmatprep.subr.mxu0 0.0
        %1037 = vmatpush1.msra.mxu0 0.0
        %1038 = vmatprep.subr.mxu0 0.0
        %1039 = vmatpush1.msra.mxu0 0.0
        %1040 = vmatprep.subr.mxu0 0.0
        %1041 = vmatpush1.msra.mxu0 0.0
        %1042 = vmatprep.subr.mxu0 0.0
        %1043 = vmatpush1.msra.mxu0 0.0
        %1044 = vmatprep.subr.mxu0 0.0
        %1045 = vmatpush1.msra.mxu0 0.0
        %1046 = vmatprep.subr.mxu0 0.0
        %1047 = vmatpush1.msra.mxu0 0.0
        %1048 = vmatprep.subr.mxu0 0.0
        %1049 = vmatpush1.msra.mxu0 0.0
        %1050 = vmatprep.subr.mxu0 0.0
        %1051 = vmatpush1.msra.mxu0 0.0
        %1052 = vmatprep.subr.mxu0 0.0
        %1053 = vmatpush1.msra.mxu0 0.0
        %1054 = vmatprep.subr.mxu0 0.0
        %1055 = vmatpush1.msra.mxu0 0.0
        %1056 = vmatprep.subr.mxu0 0.0
        %1057 = vmatpush1.msra.mxu0 0.0
        %1058 = vmatprep.subr.mxu0 0.0
        %1059 = vmatpush1.msra.mxu0 0.0
        %1060 = vmatprep.subr.mxu0 0.0
        %1061 = vmatpush1.msra.mxu0 0.0
        %1062 = vmatprep.subr.mxu0 0.0
        %1063 = vmatpush1.msra.mxu0 0.0
        %1064 = vmatprep.subr.mxu0 0.0
        %1065 = vmatpush1.msra.mxu0 0.0
        %1066 = vmatprep.subr.mxu0 0.0
        %1067 = vmatpush1.msra.mxu0 0.0
        %1068 = vmatprep.subr.mxu0 0.0
        %1069 = vmatpush1.msra.mxu0 0.0
        %1070 = vmatprep.mubr.f32.mxu0 0.0
        %1071 = vmatmul.mubr.f32.gmra.mrb[0].mxu0 %v1004
        %v1072 = vpop.f32.mrb[0].mxu0
        %v1073 = vadd.f32 0.0, %v1072
        %v1074 = vpop.f32.mrb[0].mxu0
        %1075 = vdwg.mxu0
        %v1076 = vld [vmem:[%s7 + $0x20] sm:$0xff]
        %v1077 = vld [vmem:[%s7 + $0x28] sm:$0xff]
        %v1078 = vld [vmem:[%s7 + $0x30] sm:$0xff]
        %v1079 = vld [vmem:[%s7 + $0x38] sm:$0xff]
        %v1081 = vsel %vm427, %v1073, 0
        %1083 = vmatprep.subr.mxu0 0.0
        %1084 = vmatpush1.msra.mxu0 %v1076
        %1085 = vmatprep.subr.mxu0 0.0
        %1086 = vmatpush1.msra.mxu0 %v1077
        %1087 = vmatprep.subr.mxu0 0.0
        %1088 = vmatpush1.msra.mxu0 %v1078
        %1089 = vmatprep.subr.mxu0 0.0
        %1090 = vmatpush1.msra.mxu0 %v1079
        %1091 = vmatprep.subr.mxu0 0.0
        %1092 = vmatpush1.msra.mxu0 0.0
        %1093 = vmatprep.subr.mxu0 0.0
        %1094 = vmatpush1.msra.mxu0 0.0
        %1095 = vmatprep.subr.mxu0 0.0
        %1096 = vmatpush1.msra.mxu0 0.0
        %1097 = vmatprep.subr.mxu0 0.0
        %1098 = vmatpush1.msra.mxu0 0.0
        %1099 = vmatprep.subr.mxu0 0.0
        %1100 = vmatpush1.msra.mxu0 0.0
        %1101 = vmatprep.subr.mxu0 0.0
        %1102 = vmatpush1.msra.mxu0 0.0
        %1103 = vmatprep.subr.mxu0 0.0
        %1104 = vmatpush1.msra.mxu0 0.0
        %1105 = vmatprep.subr.mxu0 0.0
        %1106 = vmatpush1.msra.mxu0 0.0
        %1107 = vmatprep.subr.mxu0 0.0
        %1108 = vmatpush1.msra.mxu0 0.0
        %1109 = vmatprep.subr.mxu0 0.0
        %1110 = vmatpush1.msra.mxu0 0.0
        %1111 = vmatprep.subr.mxu0 0.0
        %1112 = vmatpush1.msra.mxu0 0.0
        %1113 = vmatprep.subr.mxu0 0.0
        %1114 = vmatpush1.msra.mxu0 0.0
        %1115 = vmatprep.subr.mxu0 0.0
        %1116 = vmatpush1.msra.mxu0 0.0
        %1117 = vmatprep.subr.mxu0 0.0
        %1118 = vmatpush1.msra.mxu0 0.0
        %1119 = vmatprep.subr.mxu0 0.0
        %1120 = vmatpush1.msra.mxu0 0.0
        %1121 = vmatprep.subr.mxu0 0.0
        %1122 = vmatpush1.msra.mxu0 0.0
        %1123 = vmatprep.subr.mxu0 0.0
        %1124 = vmatpush1.msra.mxu0 0.0
        %1125 = vmatprep.subr.mxu0 0.0
        %1126 = vmatpush1.msra.mxu0 0.0
        %1127 = vmatprep.subr.mxu0 0.0
        %1128 = vmatpush1.msra.mxu0 0.0
        %1129 = vmatprep.subr.mxu0 0.0
        %1130 = vmatpush1.msra.mxu0 0.0
        %1131 = vmatprep.subr.mxu0 0.0
        %1132 = vmatpush1.msra.mxu0 0.0
        %1133 = vmatprep.subr.mxu0 0.0
        %1134 = vmatpush1.msra.mxu0 0.0
        %1135 = vmatprep.subr.mxu0 0.0
        %1136 = vmatpush1.msra.mxu0 0.0
        %1137 = vmatprep.subr.mxu0 0.0
        %1138 = vmatpush1.msra.mxu0 0.0
        %1139 = vmatprep.subr.mxu0 0.0
        %1140 = vmatpush1.msra.mxu0 0.0
        %1141 = vmatprep.subr.mxu0 0.0
        %1142 = vmatpush1.msra.mxu0 0.0
        %1143 = vmatprep.subr.mxu0 0.0
        %1144 = vmatpush1.msra.mxu0 0.0
        %1145 = vmatprep.subr.mxu0 0.0
        %1146 = vmatpush1.msra.mxu0 0.0
        %1147 = vmatprep.mubr.f32.mxu0 0.0
        %1148 = vmatmul.mubr.f32.gmra.mrb[0].mxu0 %v1081
        %v1149 = vpop.f32.mrb[0].mxu0
        %v1150 = vadd.f32 0.0, %v1149
        %v1151 = vpop.f32.mrb[0].mxu0
        %1152 = vdwg.mxu0
        %v1153 = vadd.f32 %v907, %v1150
        %v1154 = vadd.f32 %v402, %v1153
        %v1155 = vsel %vm427, %v1154, 0.0
        %1156 = vadd.xlane.f32.xlu0 %v1155
        %v1157 = vpop.xlane.xlu0 %1156
        %v1158 = vrcp.pop 32.0
        %v1159 = vmul.f32 %v1157, %v1158
        %v1160 = vsub.f32 %v1154, %v1159
        %v1161 = vmul.f32 %v1160, %v1160
        %v1162 = vsel %vm427, %v1161, 0.0
        %1163 = vadd.xlane.f32.xlu0 %v1162
        %v1164 = vpop.xlane.xlu0 %1163
        %v1165 = vmul.f32 %v1164, %v1158
        %v1166 = vadd.f32 %v1165, 1e-05
        %v1167 = vrsqrt.pop %v1166
        %v1168 = vmul.f32 %v1160, %v1167
        %v1170 = vlaneseq
        %v1171 = vshrl.u32 %v1170, 7
        %v1172 = vsub.s32 0, %v1171
        %v1173 = vrot.slane %v419, %v1172
        %v1175 = vmul.f32 %v1168, %v1173
        %v1177 = vlaneseq
        %v1178 = vshrl.u32 %v1177, 7
        %v1179 = vsub.s32 0, %v1178
        %v1180 = vrot.slane %v420, %v1179
        %v1182 = vadd.f32 %v1175, %v1180
        %1183 = vst.msk [vmem:[%s401] sm:$0xff] %vm427, %v1182
        %s1184 = sand.u32 %s272, 1
        %s1185 = scalar_lea.sflag [#allocation4], %s1184
        %s1186 = sand.u32 %s272, 1
        %s1187 = smul.addr %s1186, 8
        %s1188 = scalar_lea.vmem [#allocation5], %s1187
        // Predicated region
        $region69: #{tpu_custom_call.1} parent=63 // pred_check
          %p1189 = pneg %p282
        $region70: #{tpu_custom_call.1} parent=63 // pred_check_branch
          %1191 = sbr.rel (%p1189) target = $region72
        $region71: #{tpu_custom_call.1} parent=63 // pred_region
          %s1193 = ssub.s32 128, 128
          %1194 = vsyncadd %s1185, %s1193
          %s1195 = smul.addr %s28, 128
          %s1196 = scalar_lea.hbm %s11, %s1195
          %s1198 = sshll.u32 %s1188, 4
          %s1199 = int_to_ptr.vmem [resolvable:$true] %s1198
          %1201 = dma.vmem_to_hbm [thread:$0]  %s1199, 128, %s1196, %s1185
        $region72: #{tpu_custom_call.1} parent=63 // pred_fallthru
          _
      $region64: #{tpu_custom_call.1} parent=5 // pred_fallthru
        _
      %p1202 = scmp.le.s32.totalorder 2, %s23
      // Predicated region
      $region73: #{tpu_custom_call.1} parent=5 // pred_check
        %p1203 = pneg %p1202
      $region74: #{tpu_custom_call.1} parent=5 // pred_check_branch
        %1205 = sbr.rel (%p1203) target = $region76
      $region75: #{tpu_custom_call.1} parent=5 // pred_region
        %s1206 = ssub.s32 %s23, 2
        // Predicated region
        $region77: #{tpu_custom_call.1} parent=75 // pred_check
          %p1207 = pneg %p288
        $region78: #{tpu_custom_call.1} parent=75 // pred_check_branch
          %1209 = sbr.rel (%p1207) target = $region80
        $region79: #{tpu_custom_call.1} parent=75 // pred_region
          %s1210 = sand.u32 %s273, 1
          %s1211 = scalar_lea.sflag [#allocation4], %s1210
          %s1212 = sand.u32 %s273, 1
          %s1213 = smul.addr %s1212, 8
          %s1214 = scalar_lea.vmem [#allocation5], %s1213
          %1215 = dma.done %s1211, 128
        $region80: #{tpu_custom_call.1} parent=75 // pred_fallthru
          _
      $region76: #{tpu_custom_call.1} parent=5 // pred_fallthru
        _
    $region6: #{tpu_custom_call.1} parent=1 // loop_footer
      %s27 = sadd.s32 1, %s23
    $region7: #{tpu_custom_call.1} parent=1 // loop_footer_branch
      %22 = sbr.rel target = $region3
    $region8: #{tpu_custom_call.1} parent=1 // loop_exit
      _
    %1216 = vsyncpa [#allocation3], 1
    %s1217 = scalar_lea.sflag [#allocation3], 1
    %1218 = vsyncpa %s1217, 1
    %1219 = vsyncpa [#allocation4], 1
    %s1220 = scalar_lea.sflag [#allocation4], 1
    %1221 = vsyncpa %s1220, 1

</llo_original>
